<compile_context>
chip_gen: v6e
topology: v6e:2x2x1
jax: 0.10.0
libtpu: 0.0.40
codegen_flags: <defaults>
</compile_context>

<pallas_src>
import functools

import jax
import jax.numpy as jnp
from jax.experimental import pallas as pl
from jax.experimental.pallas import tpu as pltpu

EPS = 1e-5
GROUPS = 32


# ------------------------------ kernel helpers ------------------------------ #

def _group_avg(v, gs):
    """v: (1, C) per-channel stats -> averaged within contiguous groups of size gs."""
    if gs == 1:
        return v
    C = v.shape[-1]
    pos = jax.lax.broadcasted_iota(jnp.int32, v.shape, 1) % gs
    acc = v
    for k in range(1, gs):
        fwd = pltpu.roll(v, (C - k) % C, axis=1)   # fwd[c] = v[(c + k) % C]
        bwd = pltpu.roll(v, gs - k, axis=1)        # bwd[c] = v[c - (gs - k)]
        acc = acc + jnp.where(pos + k < gs, fwd, bwd)
    return acc * (1.0 / gs)


def _gn_silu(x, gamma, beta, gs):
    """GroupNorm32 (group size gs, two-pass variance) + SiLU.  x: (HW, C) f32."""
    inv_hw = 1.0 / x.shape[0]
    gmean = _group_avg(jnp.sum(x, axis=0, keepdims=True) * inv_hw, gs)       # (1, C)
    xc = x - gmean
    gvar = _group_avg(jnp.sum(xc * xc, axis=0, keepdims=True) * inv_hw, gs)  # (1, C)
    y = xc * jax.lax.rsqrt(gvar + EPS) * gamma + beta
    return y * jax.nn.sigmoid(y)


def _conv3x3_fused(h, w_ref, masks, shifts):
    """3x3 "SAME" conv on flat (HW, C) as a SINGLE MXU matmul.

    The 9 taps (pltpu.roll along HW + precomputed boundary mask) are
    concatenated on the lane axis -> (HW, 9*C) bf16 and multiplied against the
    pre-flattened (9*C, Cout) bf16 weights with an f32 accumulator.
    """
    cols = []
    for t, shift in enumerate(shifts):
        xs = h if shift == 0 else pltpu.roll(h, shift, axis=0)
        if t != 4:                                  # center tap has no boundary mask
            xs = xs * masks[:, t:t + 1]
        cols.append(xs)
    stacked = jnp.concatenate(cols, axis=-1).astype(jnp.bfloat16)   # (HW, 9*C)
    return jnp.dot(stacked, w_ref[...], preferred_element_type=jnp.float32)


# ------------------------------- fused kernel ------------------------------- #

def resblock_kernel(x_ref, emb_add_ref, masks_ref, cin_p_ref, cout_p_ref,
                    conv1_w_ref, conv2_w_ref, skip_w_ref, o_ref, *, H, W):
    """One batch sample of the full ResBlock, everything resident in VMEM.

    x_ref: (1, HW, Cin)   emb_add_ref: (1, 1, Cout)   masks_ref: (HW, 9)
    cin_p_ref: (2, Cin)   cout_p_ref: (4, Cout)
    conv1_w_ref: (9*Cin, Cout) bf16   conv2_w_ref: (9*Cout, Cout) bf16
    skip_w_ref: (Cin, Cout) bf16      o_ref: (1, HW, Cout)
    """
    HW = H * W
    x = x_ref[0]                                      # (HW, Cin) f32
    masks = masks_ref[...]                            # (HW, 9)  f32
    cin_p = cin_p_ref[...]                            # (2, Cin)
    cout_p = cout_p_ref[...]                          # (4, Cout)

    cin = x.shape[-1]
    cout = cout_p.shape[-1]
    gs1 = cin // GROUPS
    gs2 = cout // GROUPS

    # Static tap shifts, tap t = ky*3 + kx;  xs[i] = h[i + dy*W + dx] (mod HW).
    shifts = [(-((ky - 1) * W + (kx - 1))) % HW
              for ky in range(3) for kx in range(3)]

    # in_layers: GroupNorm32 + SiLU + conv3x3 (single fused matmul, K=9*Cin)
    h = _gn_silu(x, cin_p[0:1], cin_p[1:2], gs1)
    h = _conv3x3_fused(h, conv1_w_ref, masks, shifts)             # (HW, Cout) f32

    # emb_layers (SiLU+Linear+emb_b+conv1_b precomputed in wrapper), broadcast add
    h = h + emb_add_ref[0]

    # out_layers: GroupNorm32 + SiLU + Dropout(p=0, identity) + conv3x3 + bias
    h = _gn_silu(h, cout_p[0:1], cout_p[1:2], gs2)
    h = _conv3x3_fused(h, conv2_w_ref, masks, shifts) + cout_p[2:3]

    # skip_connection (1x1 conv, Cin != Cout) + residual add (epilogue).
    # TODO(synk): Cout=64 < 128 lanes -> masked vst; a (HW,64)->(HW/2,128)
    # row-pair repack would make stores lane-dense, skipped (relayout cost ~= gain here).
    o_ref[0] = (h
                + jnp.dot(x.astype(jnp.bfloat16), skip_w_ref[...],
                          preferred_element_type=jnp.float32)
                + cout_p[3:4])


# ------------------------------ ResBlock forward ----------------------------- #

@jax.jit
def resblock_forward(x_nchw, emb, p):
    x = jnp.transpose(x_nchw, (0, 2, 3, 1))                        # NCHW -> NHWC
    N, H, W, Cin = x.shape
    HW = H * W
    Cout = p["conv1_w_hwio"].shape[-1]
    x_flat = x.reshape(N, HW, Cin)

    # Hoisted emb path: SiLU + Linear (+ emb bias + conv1 bias folded in).
    e = emb * jax.nn.sigmoid(emb)
    emb_add = (e @ p["emb_w"] + p["emb_b"] + p["conv1_b"]).reshape(N, 1, Cout)

    # Precomputed 3x3 boundary masks (tap-major), shared by both convs.
    yy, xx = jnp.meshgrid(jnp.arange(H), jnp.arange(W), indexing="ij")
    yy, xx = yy.reshape(-1), xx.reshape(-1)
    masks = jnp.stack(
        [((yy + dy >= 0) & (yy + dy < H) & (xx + dx >= 0) & (xx + dx < W))
         for dy in (-1, 0, 1) for dx in (-1, 0, 1)],
        axis=-1).astype(jnp.float32)                               # (HW, 9)

    # Packed tiny per-channel params.
    cin_p = jnp.concatenate([p["gn1_gamma"], p["gn1_beta"]], axis=0)          # (2, Cin)
    cout_p = jnp.concatenate([p["gn2_gamma"], p["gn2_beta"],
                              p["conv2_b"], p["skip_b"]], axis=0)             # (4, Cout)

    # Fused tap-major conv weights (row = tap*Cin + cin), bf16 for the MXU.
    conv1_w = p["conv1_w_hwio"].reshape(9 * Cin, Cout).astype(jnp.bfloat16)
    conv2_w = p["conv2_w_hwio"].reshape(9 * Cout, Cout).astype(jnp.bfloat16)
    skip_w = p["skip_w"].astype(jnp.bfloat16)

    kernel = functools.partial(resblock_kernel, H=H, W=W)
    out = pl.pallas_call(
        kernel,
        out_shape=jax.ShapeDtypeStruct((N, HW, Cout), jnp.float32),
        grid=(N,),
        in_specs=[
            pl.BlockSpec((1, HW, Cin), lambda b: (b, 0, 0)),        # x
            pl.BlockSpec((1, 1, Cout), lambda b: (b, 0, 0)),        # emb_add
            pl.BlockSpec((HW, 9), lambda b: (0, 0)),                # boundary masks
            pl.BlockSpec((2, Cin), lambda b: (0, 0)),               # gn1 gamma/beta
            pl.BlockSpec((4, Cout), lambda b: (0, 0)),              # gn2 g/b, conv2_b, skip_b
            pl.BlockSpec((9 * Cin, Cout), lambda b: (0, 0)),        # conv1_w (fused taps)
            pl.BlockSpec((9 * Cout, Cout), lambda b: (0, 0)),       # conv2_w (fused taps)
            pl.BlockSpec((Cin, Cout), lambda b: (0, 0)),            # skip_w
        ],
        out_specs=pl.BlockSpec((1, HW, Cout), lambda b: (b, 0, 0)),
        compiler_params=pltpu.CompilerParams(
            dimension_semantics=("parallel",)),
    )(x_flat, emb_add, masks, cin_p, cout_p, conv1_w, conv2_w, skip_w)

    return jnp.transpose(out.reshape(N, H, W, Cout), (0, 3, 1, 2))  # NHWC -> NCHW


# ------------------------------ pure-JAX reference --------------------------- #

def _silu(x):
    return x * jax.nn.sigmoid(x)


def _gn_ref(x, gamma, beta, groups):
    N, H, W, C = x.shape
    xg = x.reshape(N, H * W, groups, C // groups)
    m = xg.mean(axis=(1, 3), keepdims=True)
    v = jnp.mean((xg - m) ** 2, axis=(1, 3), keepdims=True)
    y = (xg - m) * jax.lax.rsqrt(v + EPS)
    return y.reshape(N, H, W, C) * gamma.reshape(1, 1, 1, C) + beta.reshape(1, 1, 1, C)


def _conv3_ref(x, w_hwio, b):
    y = jax.lax.conv_general_dilated(x, w_hwio, (1, 1), "SAME",
                                     dimension_numbers=("NHWC", "HWIO", "NHWC"))
    return y + b.reshape(1, 1, 1, -1)


def resblock_reference(x_nchw, emb, p):
    x = jnp.transpose(x_nchw, (0, 2, 3, 1))
    h = _conv3_ref(_silu(_gn_ref(x, p["gn1_gamma"][0], p["gn1_beta"][0], GROUPS)),
                   p["conv1_w_hwio"], p["conv1_b"][0])
    e = jnp.dot(_silu(emb), p["emb_w"]) + p["emb_b"][0]
    h = h + e[:, None, None, :]
    h = _conv3_ref(_silu(_gn_ref(h, p["gn2_gamma"][0], p["gn2_beta"][0], GROUPS)),
                   p["conv2_w_hwio"], p["conv2_b"][0])
    skip = jnp.einsum("nhwc,co->nhwo", x, p["skip_w"]) + p["skip_b"][0]
    return jnp.transpose(skip + h, (0, 3, 1, 2))


# ------------------------------------ main ----------------------------------- #

if __name__ == "__main__":
    N, C_IN, C_OUT, H, W, E = 2, 32, 64, 8, 8, 16

    key = jax.random.PRNGKey(0)
    keys = jax.random.split(key, 10)

    x = jax.random.normal(keys[0], (N, C_IN, H, W), jnp.float32)     # NCHW input
    emb = jax.random.normal(keys[1], (N, E), jnp.float32)

    params = {
        # normalization(channels): GroupNorm32(32, C), affine init = (ones, zeros)
        "gn1_gamma": jnp.ones((1, C_IN), jnp.float32),
        "gn1_beta": jnp.zeros((1, C_IN), jnp.float32),
        "gn2_gamma": jnp.ones((1, C_OUT), jnp.float32),
        "gn2_beta": jnp.zeros((1, C_OUT), jnp.float32),
        # conv_nd(2, C_IN, C_OUT, 3, padding=1)
        "conv1_w_hwio": 0.1 * jax.random.normal(keys[2], (3, 3, C_IN, C_OUT), jnp.float32),
        "conv1_b": 0.1 * jax.random.normal(keys[4], (1, C_OUT), jnp.float32),
        # zero_module(conv_nd(...)) -- small random instead of zeros (see header TODO)
        "conv2_w_hwio": 0.1 * jax.random.normal(keys[3], (3, 3, C_OUT, C_OUT), jnp.float32),
        "conv2_b": 0.1 * jax.random.normal(keys[5], (1, C_OUT), jnp.float32),
        # emb_layers: linear(E, C_OUT)
        "emb_w": 0.1 * jax.random.normal(keys[6], (E, C_OUT), jnp.float32),
        "emb_b": 0.1 * jax.random.normal(keys[7], (1, C_OUT), jnp.float32),
        # skip_connection: conv_nd(2, C_IN, C_OUT, 1)
        "skip_w": 0.1 * jax.random.normal(keys[8], (C_IN, C_OUT), jnp.float32),
        "skip_b": 0.1 * jax.random.normal(keys[9], (1, C_OUT), jnp.float32),
    }

    out = resblock_forward(x, emb, params)
    out = jax.block_until_ready(out)

    ref = resblock_reference(x, emb, params)
    assert out.shape == (N, C_OUT, H, W), out.shape
    err = float(jnp.max(jnp.abs(out - ref)))
    scale = float(jnp.max(jnp.abs(ref)))
    # bf16 MXU operands (f32 accumulation): tolerance relaxed vs the f32 reference.
    assert err <= 0.03 * scale + 0.01, (err, scale)

    print("KERNEL_OK")
</pallas_src>

<mosaic_0001>
module attributes {stable_mosaic.version = 11 : i64} {
  func.func @resblock_kernel(%arg0: i32, %arg1: memref<1x64x32xf32, #tpu.memory_space<vmem>>, %arg2: memref<1x1x64xf32, #tpu.memory_space<vmem>>, %arg3: memref<64x9xf32, #tpu.memory_space<vmem>>, %arg4: memref<2x32xf32, #tpu.memory_space<vmem>>, %arg5: memref<4x64xf32, #tpu.memory_space<vmem>>, %arg6: memref<288x64xbf16, #tpu.memory_space<vmem>>, %arg7: memref<576x64xbf16, #tpu.memory_space<vmem>>, %arg8: memref<32x64xbf16, #tpu.memory_space<vmem>>, %arg9: memref<1x64x64xf32, #tpu.memory_space<vmem>>) attributes {dimension_semantics = [#tpu.dimension_semantics<parallel>], iteration_bounds = array<i64: 2>, scalar_prefetch = 0 : i64, scratch_operands = 0 : i64, tpu.core_type = #tpu.core_type<tc>, window_params = [{transform_indices = @transform_0, window_bounds = array<i64: 1, 64, 32>}, {transform_indices = @transform_1, window_bounds = array<i64: 1, 1, 64>}, {pipeline_mode = #tpu.pipeline_mode<synchronous>, transform_indices = @transform_2, window_bounds = array<i64: 64, 9>}, {pipeline_mode = #tpu.pipeline_mode<synchronous>, transform_indices = @transform_3, window_bounds = array<i64: 2, 32>}, {pipeline_mode = #tpu.pipeline_mode<synchronous>, transform_indices = @transform_4, window_bounds = array<i64: 4, 64>}, {pipeline_mode = #tpu.pipeline_mode<synchronous>, transform_indices = @transform_5, window_bounds = array<i64: 288, 64>}, {pipeline_mode = #tpu.pipeline_mode<synchronous>, transform_indices = @transform_6, window_bounds = array<i64: 576, 64>}, {pipeline_mode = #tpu.pipeline_mode<synchronous>, transform_indices = @transform_7, window_bounds = array<i64: 32, 64>}, {transform_indices = @transform_8, window_bounds = array<i64: 1, 64, 64>}]} {
    %c0 = arith.constant 0 : index
    %c0_0 = arith.constant 0 : index
    %c0_1 = arith.constant 0 : index
    %0 = vector.load %arg1[%c0, %c0_0, %c0_1] : memref<1x64x32xf32, #tpu.memory_space<vmem>>, vector<1x64x32xf32>
    %1 = vector.shape_cast %0 : vector<1x64x32xf32> to vector<64x32xf32>
    %c0_2 = arith.constant 0 : index
    %c0_3 = arith.constant 0 : index
    %2 = vector.load %arg3[%c0_2, %c0_3] : memref<64x9xf32, #tpu.memory_space<vmem>>, vector<64x9xf32>
    %c0_4 = arith.constant 0 : index
    %c0_5 = arith.constant 0 : index
    %3 = vector.load %arg4[%c0_4, %c0_5] : memref<2x32xf32, #tpu.memory_space<vmem>>, vector<2x32xf32>
    %c0_6 = arith.constant 0 : index
    %c0_7 = arith.constant 0 : index
    %4 = vector.load %arg5[%c0_6, %c0_7] : memref<4x64xf32, #tpu.memory_space<vmem>>, vector<4x64xf32>
    %5 = vector.extract_strided_slice %3 {offsets = [0, 0], sizes = [1, 32], strides = [1, 1]} : vector<2x32xf32> to vector<1x32xf32>
    %6 = vector.extract_strided_slice %3 {offsets = [1, 0], sizes = [1, 32], strides = [1, 1]} : vector<2x32xf32> to vector<1x32xf32>
    %cst = arith.constant dense<0.000000e+00> : vector<32xf32>
    %7 = vector.multi_reduction <add>, %1, %cst [0] : vector<64x32xf32> to vector<32xf32>
    %8 = vector.shape_cast %7 : vector<32xf32> to vector<1x32xf32>
    %cst_8 = arith.constant 1.562500e-02 : f32
    %9 = vector.broadcast %cst_8 : f32 to vector<1x32xf32>
    %10 = arith.mulf %8, %9 : vector<1x32xf32>
    %11 = vector.broadcast %10 : vector<1x32xf32> to vector<64x32xf32>
    %12 = arith.subf %1, %11 : vector<64x32xf32>
    %13 = arith.mulf %12, %12 : vector<64x32xf32>
    %cst_9 = arith.constant dense<0.000000e+00> : vector<32xf32>
    %14 = vector.multi_reduction <add>, %13, %cst_9 [0] : vector<64x32xf32> to vector<32xf32>
    %15 = vector.shape_cast %14 : vector<32xf32> to vector<1x32xf32>
    %cst_10 = arith.constant 1.562500e-02 : f32
    %16 = vector.broadcast %cst_10 : f32 to vector<1x32xf32>
    %17 = arith.mulf %15, %16 : vector<1x32xf32>
    %cst_11 = arith.constant 9.99999974E-6 : f32
    %18 = vector.broadcast %cst_11 : f32 to vector<1x32xf32>
    %19 = arith.addf %17, %18 : vector<1x32xf32>
    %20 = math.rsqrt %19 : vector<1x32xf32>
    %21 = vector.broadcast %20 : vector<1x32xf32> to vector<64x32xf32>
    %22 = arith.mulf %12, %21 : vector<64x32xf32>
    %23 = vector.broadcast %5 : vector<1x32xf32> to vector<64x32xf32>
    %24 = arith.mulf %22, %23 : vector<64x32xf32>
    %25 = vector.broadcast %6 : vector<1x32xf32> to vector<64x32xf32>
    %26 = arith.addf %24, %25 : vector<64x32xf32>
    %27 = arith.negf %26 : vector<64x32xf32>
    %28 = math.exp %27 : vector<64x32xf32>
    %cst_12 = arith.constant 1.000000e+00 : f32
    %29 = vector.broadcast %cst_12 : f32 to vector<64x32xf32>
    %30 = arith.addf %29, %28 : vector<64x32xf32>
    %31 = arith.divf %29, %30 : vector<64x32xf32>
    %32 = arith.mulf %26, %31 : vector<64x32xf32>
    %c9_i32 = arith.constant 9 : i32
    %33 = tpu.dynamic_rotate %32 by %c9_i32 dim 0 : vector<64x32xf32>, i32 -> vector<64x32xf32>
    %34 = vector.extract_strided_slice %2 {offsets = [0, 0], sizes = [64, 1], strides = [1, 1]} : vector<64x9xf32> to vector<64x1xf32>
    %35 = vector.broadcast %34 : vector<64x1xf32> to vector<64x32xf32>
    %36 = arith.mulf %33, %35 : vector<64x32xf32>
    %c8_i32 = arith.constant 8 : i32
    %37 = tpu.dynamic_rotate %32 by %c8_i32 dim 0 : vector<64x32xf32>, i32 -> vector<64x32xf32>
    %38 = vector.extract_strided_slice %2 {offsets = [0, 1], sizes = [64, 1], strides = [1, 1]} : vector<64x9xf32> to vector<64x1xf32>
    %39 = vector.broadcast %38 : vector<64x1xf32> to vector<64x32xf32>
    %40 = arith.mulf %37, %39 : vector<64x32xf32>
    %c7_i32 = arith.constant 7 : i32
    %41 = tpu.dynamic_rotate %32 by %c7_i32 dim 0 : vector<64x32xf32>, i32 -> vector<64x32xf32>
    %42 = vector.extract_strided_slice %2 {offsets = [0, 2], sizes = [64, 1], strides = [1, 1]} : vector<64x9xf32> to vector<64x1xf32>
    %43 = vector.broadcast %42 : vector<64x1xf32> to vector<64x32xf32>
    %44 = arith.mulf %41, %43 : vector<64x32xf32>
    %c1_i32 = arith.constant 1 : i32
    %45 = tpu.dynamic_rotate %32 by %c1_i32 dim 0 : vector<64x32xf32>, i32 -> vector<64x32xf32>
    %46 = vector.extract_strided_slice %2 {offsets = [0, 3], sizes = [64, 1], strides = [1, 1]} : vector<64x9xf32> to vector<64x1xf32>
    %47 = vector.broadcast %46 : vector<64x1xf32> to vector<64x32xf32>
    %48 = arith.mulf %45, %47 : vector<64x32xf32>
    %c63_i32 = arith.constant 63 : i32
    %49 = tpu.dynamic_rotate %32 by %c63_i32 dim 0 : vector<64x32xf32>, i32 -> vector<64x32xf32>
    %50 = vector.extract_strided_slice %2 {offsets = [0, 5], sizes = [64, 1], strides = [1, 1]} : vector<64x9xf32> to vector<64x1xf32>
    %51 = vector.broadcast %50 : vector<64x1xf32> to vector<64x32xf32>
    %52 = arith.mulf %49, %51 : vector<64x32xf32>
    %c57_i32 = arith.constant 57 : i32
    %53 = tpu.dynamic_rotate %32 by %c57_i32 dim 0 : vector<64x32xf32>, i32 -> vector<64x32xf32>
    %54 = vector.extract_strided_slice %2 {offsets = [0, 6], sizes = [64, 1], strides = [1, 1]} : vector<64x9xf32> to vector<64x1xf32>
    %55 = vector.broadcast %54 : vector<64x1xf32> to vector<64x32xf32>
    %56 = arith.mulf %53, %55 : vector<64x32xf32>
    %c56_i32 = arith.constant 56 : i32
    %57 = tpu.dynamic_rotate %32 by %c56_i32 dim 0 : vector<64x32xf32>, i32 -> vector<64x32xf32>
    %58 = vector.extract_strided_slice %2 {offsets = [0, 7], sizes = [64, 1], strides = [1, 1]} : vector<64x9xf32> to vector<64x1xf32>
    %59 = vector.broadcast %58 : vector<64x1xf32> to vector<64x32xf32>
    %60 = arith.mulf %57, %59 : vector<64x32xf32>
    %c55_i32 = arith.constant 55 : i32
    %61 = tpu.dynamic_rotate %32 by %c55_i32 dim 0 : vector<64x32xf32>, i32 -> vector<64x32xf32>
    %62 = vector.extract_strided_slice %2 {offsets = [0, 8], sizes = [64, 1], strides = [1, 1]} : vector<64x9xf32> to vector<64x1xf32>
    %63 = vector.broadcast %62 : vector<64x1xf32> to vector<64x32xf32>
    %64 = arith.mulf %61, %63 : vector<64x32xf32>
    %65 = tpu.concatenate %36, %40, %44, %48, %32, %52, %56, %60, %64 in 1 : vector<64x32xf32>, vector<64x32xf32>, vector<64x32xf32>, vector<64x32xf32>, vector<64x32xf32>, vector<64x32xf32>, vector<64x32xf32>, vector<64x32xf32>, vector<64x32xf32> -> vector<64x288xf32>
    %66 = arith.truncf %65 : vector<64x288xf32> to vector<64x288xbf16>
    %c0_13 = arith.constant 0 : index
    %c0_14 = arith.constant 0 : index
    %67 = vector.load %arg6[%c0_13, %c0_14] : memref<288x64xbf16, #tpu.memory_space<vmem>>, vector<288x64xbf16>
    %cst_15 = arith.constant dense<0.000000e+00> : vector<64x64xf32>
    %68 = tpu.matmul %66, %67, %cst_15 {dimension_numbers = #tpu.dot_dimension_numbers<[1], [0], [0], [1], [0, 0, 1, 1], [], []>} : vector<64x288xbf16>, vector<288x64xbf16>, vector<64x64xf32> -> vector<64x64xf32>
    %c0_16 = arith.constant 0 : index
    %c0_17 = arith.constant 0 : index
    %c0_18 = arith.constant 0 : index
    %69 = vector.load %arg2[%c0_16, %c0_17, %c0_18] : memref<1x1x64xf32, #tpu.memory_space<vmem>>, vector<1x1x64xf32>
    %70 = vector.shape_cast %69 : vector<1x1x64xf32> to vector<1x64xf32>
    %71 = vector.broadcast %70 : vector<1x64xf32> to vector<64x64xf32>
    %72 = arith.addf %68, %71 : vector<64x64xf32>
    %73 = vector.extract_strided_slice %4 {offsets = [0, 0], sizes = [1, 64], strides = [1, 1]} : vector<4x64xf32> to vector<1x64xf32>
    %74 = vector.extract_strided_slice %4 {offsets = [1, 0], sizes = [1, 64], strides = [1, 1]} : vector<4x64xf32> to vector<1x64xf32>
    %cst_19 = arith.constant dense<0.000000e+00> : vector<64xf32>
    %75 = vector.multi_reduction <add>, %72, %cst_19 [0] : vector<64x64xf32> to vector<64xf32>
    %76 = vector.shape_cast %75 : vector<64xf32> to vector<1x64xf32>
    %cst_20 = arith.constant 1.562500e-02 : f32
    %77 = vector.broadcast %cst_20 : f32 to vector<1x64xf32>
    %78 = arith.mulf %76, %77 : vector<1x64xf32>
    %79 = tpu.iota {dimensions = array<i32: 1>} : vector<1x64xi32>
    %c2_i32 = arith.constant 2 : i32
    %c0_i32 = arith.constant 0 : i32
    %80 = arith.cmpi eq, %c2_i32, %c0_i32 : i32
    %c1_i32_21 = arith.constant 1 : i32
    %81 = arith.select %80, %c1_i32_21, %c2_i32 : i32
    %82 = vector.broadcast %81 : i32 to vector<1x64xi32>
    %83 = arith.remsi %79, %82 : vector<1x64xi32>
    %c0_i32_22 = arith.constant 0 : i32
    %84 = vector.broadcast %c0_i32_22 : i32 to vector<1x64xi32>
    %85 = arith.cmpi ne, %83, %84 : vector<1x64xi32>
    %c0_i32_23 = arith.constant 0 : i32
    %86 = vector.broadcast %c0_i32_23 : i32 to vector<1x64xi32>
    %87 = arith.cmpi slt, %83, %86 : vector<1x64xi32>
    %c0_i32_24 = arith.constant 0 : i32
    %88 = arith.cmpi slt, %81, %c0_i32_24 : i32
    %89 = vector.broadcast %88 : i1 to vector<1x64xi1>
    %90 = vector.broadcast %89 : vector<1x64xi1> to vector<1x64xi1>
    %91 = arith.xori %87, %90 : vector<1x64xi1>
    %92 = arith.andi %91, %85 : vector<1x64xi1>
    %93 = vector.broadcast %81 : i32 to vector<1x64xi32>
    %94 = arith.addi %83, %93 : vector<1x64xi32>
    %95 = arith.select %92, %94, %83 : vector<1x64xi1>, vector<1x64xi32>
    %c63_i32_25 = arith.constant 63 : i32
    %96 = tpu.dynamic_rotate %78 by %c63_i32_25 dim 1 : vector<1x64xf32>, i32 -> vector<1x64xf32>
    %c1_i32_26 = arith.constant 1 : i32
    %97 = tpu.dynamic_rotate %78 by %c1_i32_26 dim 1 : vector<1x64xf32>, i32 -> vector<1x64xf32>
    %c1_i32_27 = arith.constant 1 : i32
    %98 = vector.broadcast %c1_i32_27 : i32 to vector<1x64xi32>
    %99 = arith.addi %95, %98 : vector<1x64xi32>
    %c2_i32_28 = arith.constant 2 : i32
    %100 = vector.broadcast %c2_i32_28 : i32 to vector<1x64xi32>
    %101 = arith.cmpi slt, %99, %100 : vector<1x64xi32>
    %102 = arith.select %101, %96, %97 : vector<1x64xi1>, vector<1x64xf32>
    %103 = arith.addf %78, %102 : vector<1x64xf32>
    %cst_29 = arith.constant 5.000000e-01 : f32
    %104 = vector.broadcast %cst_29 : f32 to vector<1x64xf32>
    %105 = arith.mulf %103, %104 : vector<1x64xf32>
    %106 = vector.broadcast %105 : vector<1x64xf32> to vector<64x64xf32>
    %107 = arith.subf %72, %106 : vector<64x64xf32>
    %108 = arith.mulf %107, %107 : vector<64x64xf32>
    %cst_30 = arith.constant dense<0.000000e+00> : vector<64xf32>
    %109 = vector.multi_reduction <add>, %108, %cst_30 [0] : vector<64x64xf32> to vector<64xf32>
    %110 = vector.shape_cast %109 : vector<64xf32> to vector<1x64xf32>
    %cst_31 = arith.constant 1.562500e-02 : f32
    %111 = vector.broadcast %cst_31 : f32 to vector<1x64xf32>
    %112 = arith.mulf %110, %111 : vector<1x64xf32>
    %113 = tpu.iota {dimensions = array<i32: 1>} : vector<1x64xi32>
    %c2_i32_32 = arith.constant 2 : i32
    %c0_i32_33 = arith.constant 0 : i32
    %114 = arith.cmpi eq, %c2_i32_32, %c0_i32_33 : i32
    %c1_i32_34 = arith.constant 1 : i32
    %115 = arith.select %114, %c1_i32_34, %c2_i32_32 : i32
    %116 = vector.broadcast %115 : i32 to vector<1x64xi32>
    %117 = arith.remsi %113, %116 : vector<1x64xi32>
    %c0_i32_35 = arith.constant 0 : i32
    %118 = vector.broadcast %c0_i32_35 : i32 to vector<1x64xi32>
    %119 = arith.cmpi ne, %117, %118 : vector<1x64xi32>
    %c0_i32_36 = arith.constant 0 : i32
    %120 = vector.broadcast %c0_i32_36 : i32 to vector<1x64xi32>
    %121 = arith.cmpi slt, %117, %120 : vector<1x64xi32>
    %c0_i32_37 = arith.constant 0 : i32
    %122 = arith.cmpi slt, %115, %c0_i32_37 : i32
    %123 = vector.broadcast %122 : i1 to vector<1x64xi1>
    %124 = vector.broadcast %123 : vector<1x64xi1> to vector<1x64xi1>
    %125 = arith.xori %121, %124 : vector<1x64xi1>
    %126 = arith.andi %125, %119 : vector<1x64xi1>
    %127 = vector.broadcast %115 : i32 to vector<1x64xi32>
    %128 = arith.addi %117, %127 : vector<1x64xi32>
    %129 = arith.select %126, %128, %117 : vector<1x64xi1>, vector<1x64xi32>
    %c63_i32_38 = arith.constant 63 : i32
    %130 = tpu.dynamic_rotate %112 by %c63_i32_38 dim 1 : vector<1x64xf32>, i32 -> vector<1x64xf32>
    %c1_i32_39 = arith.constant 1 : i32
    %131 = tpu.dynamic_rotate %112 by %c1_i32_39 dim 1 : vector<1x64xf32>, i32 -> vector<1x64xf32>
    %c1_i32_40 = arith.constant 1 : i32
    %132 = vector.broadcast %c1_i32_40 : i32 to vector<1x64xi32>
    %133 = arith.addi %129, %132 : vector<1x64xi32>
    %c2_i32_41 = arith.constant 2 : i32
    %134 = vector.broadcast %c2_i32_41 : i32 to vector<1x64xi32>
    %135 = arith.cmpi slt, %133, %134 : vector<1x64xi32>
    %136 = arith.select %135, %130, %131 : vector<1x64xi1>, vector<1x64xf32>
    %137 = arith.addf %112, %136 : vector<1x64xf32>
    %cst_42 = arith.constant 5.000000e-01 : f32
    %138 = vector.broadcast %cst_42 : f32 to vector<1x64xf32>
    %139 = arith.mulf %137, %138 : vector<1x64xf32>
    %cst_43 = arith.constant 9.99999974E-6 : f32
    %140 = vector.broadcast %cst_43 : f32 to vector<1x64xf32>
    %141 = arith.addf %139, %140 : vector<1x64xf32>
    %142 = math.rsqrt %141 : vector<1x64xf32>
    %143 = vector.broadcast %142 : vector<1x64xf32> to vector<64x64xf32>
    %144 = arith.mulf %107, %143 : vector<64x64xf32>
    %145 = vector.broadcast %73 : vector<1x64xf32> to vector<64x64xf32>
    %146 = arith.mulf %144, %145 : vector<64x64xf32>
    %147 = vector.broadcast %74 : vector<1x64xf32> to vector<64x64xf32>
    %148 = arith.addf %146, %147 : vector<64x64xf32>
    %149 = arith.negf %148 : vector<64x64xf32>
    %150 = math.exp %149 : vector<64x64xf32>
    %cst_44 = arith.constant 1.000000e+00 : f32
    %151 = vector.broadcast %cst_44 : f32 to vector<64x64xf32>
    %152 = arith.addf %151, %150 : vector<64x64xf32>
    %153 = arith.divf %151, %152 : vector<64x64xf32>
    %154 = arith.mulf %148, %153 : vector<64x64xf32>
    %c9_i32_45 = arith.constant 9 : i32
    %155 = tpu.dynamic_rotate %154 by %c9_i32_45 dim 0 : vector<64x64xf32>, i32 -> vector<64x64xf32>
    %156 = vector.extract_strided_slice %2 {offsets = [0, 0], sizes = [64, 1], strides = [1, 1]} : vector<64x9xf32> to vector<64x1xf32>
    %157 = vector.broadcast %156 : vector<64x1xf32> to vector<64x64xf32>
    %158 = arith.mulf %155, %157 : vector<64x64xf32>
    %c8_i32_46 = arith.constant 8 : i32
    %159 = tpu.dynamic_rotate %154 by %c8_i32_46 dim 0 : vector<64x64xf32>, i32 -> vector<64x64xf32>
    %160 = vector.extract_strided_slice %2 {offsets = [0, 1], sizes = [64, 1], strides = [1, 1]} : vector<64x9xf32> to vector<64x1xf32>
    %161 = vector.broadcast %160 : vector<64x1xf32> to vector<64x64xf32>
    %162 = arith.mulf %159, %161 : vector<64x64xf32>
    %c7_i32_47 = arith.constant 7 : i32
    %163 = tpu.dynamic_rotate %154 by %c7_i32_47 dim 0 : vector<64x64xf32>, i32 -> vector<64x64xf32>
    %164 = vector.extract_strided_slice %2 {offsets = [0, 2], sizes = [64, 1], strides = [1, 1]} : vector<64x9xf32> to vector<64x1xf32>
    %165 = vector.broadcast %164 : vector<64x1xf32> to vector<64x64xf32>
    %166 = arith.mulf %163, %165 : vector<64x64xf32>
    %c1_i32_48 = arith.constant 1 : i32
    %167 = tpu.dynamic_rotate %154 by %c1_i32_48 dim 0 : vector<64x64xf32>, i32 -> vector<64x64xf32>
    %168 = vector.extract_strided_slice %2 {offsets = [0, 3], sizes = [64, 1], strides = [1, 1]} : vector<64x9xf32> to vector<64x1xf32>
    %169 = vector.broadcast %168 : vector<64x1xf32> to vector<64x64xf32>
    %170 = arith.mulf %167, %169 : vector<64x64xf32>
    %c63_i32_49 = arith.constant 63 : i32
    %171 = tpu.dynamic_rotate %154 by %c63_i32_49 dim 0 : vector<64x64xf32>, i32 -> vector<64x64xf32>
    %172 = vector.extract_strided_slice %2 {offsets = [0, 5], sizes = [64, 1], strides = [1, 1]} : vector<64x9xf32> to vector<64x1xf32>
    %173 = vector.broadcast %172 : vector<64x1xf32> to vector<64x64xf32>
    %174 = arith.mulf %171, %173 : vector<64x64xf32>
    %c57_i32_50 = arith.constant 57 : i32
    %175 = tpu.dynamic_rotate %154 by %c57_i32_50 dim 0 : vector<64x64xf32>, i32 -> vector<64x64xf32>
    %176 = vector.extract_strided_slice %2 {offsets = [0, 6], sizes = [64, 1], strides = [1, 1]} : vector<64x9xf32> to vector<64x1xf32>
    %177 = vector.broadcast %176 : vector<64x1xf32> to vector<64x64xf32>
    %178 = arith.mulf %175, %177 : vector<64x64xf32>
    %c56_i32_51 = arith.constant 56 : i32
    %179 = tpu.dynamic_rotate %154 by %c56_i32_51 dim 0 : vector<64x64xf32>, i32 -> vector<64x64xf32>
    %180 = vector.extract_strided_slice %2 {offsets = [0, 7], sizes = [64, 1], strides = [1, 1]} : vector<64x9xf32> to vector<64x1xf32>
    %181 = vector.broadcast %180 : vector<64x1xf32> to vector<64x64xf32>
    %182 = arith.mulf %179, %181 : vector<64x64xf32>
    %c55_i32_52 = arith.constant 55 : i32
    %183 = tpu.dynamic_rotate %154 by %c55_i32_52 dim 0 : vector<64x64xf32>, i32 -> vector<64x64xf32>
    %184 = vector.extract_strided_slice %2 {offsets = [0, 8], sizes = [64, 1], strides = [1, 1]} : vector<64x9xf32> to vector<64x1xf32>
    %185 = vector.broadcast %184 : vector<64x1xf32> to vector<64x64xf32>
    %186 = arith.mulf %183, %185 : vector<64x64xf32>
    %187 = tpu.concatenate %158, %162, %166, %170, %154, %174, %178, %182, %186 in 1 : vector<64x64xf32>, vector<64x64xf32>, vector<64x64xf32>, vector<64x64xf32>, vector<64x64xf32>, vector<64x64xf32>, vector<64x64xf32>, vector<64x64xf32>, vector<64x64xf32> -> vector<64x576xf32>
    %188 = arith.truncf %187 : vector<64x576xf32> to vector<64x576xbf16>
    %c0_53 = arith.constant 0 : index
    %c0_54 = arith.constant 0 : index
    %189 = vector.load %arg7[%c0_53, %c0_54] : memref<576x64xbf16, #tpu.memory_space<vmem>>, vector<576x64xbf16>
    %cst_55 = arith.constant dense<0.000000e+00> : vector<64x64xf32>
    %190 = tpu.matmul %188, %189, %cst_55 {dimension_numbers = #tpu.dot_dimension_numbers<[1], [0], [0], [1], [0, 0, 1, 1], [], []>} : vector<64x576xbf16>, vector<576x64xbf16>, vector<64x64xf32> -> vector<64x64xf32>
    %191 = vector.extract_strided_slice %4 {offsets = [2, 0], sizes = [1, 64], strides = [1, 1]} : vector<4x64xf32> to vector<1x64xf32>
    %192 = vector.broadcast %191 : vector<1x64xf32> to vector<64x64xf32>
    %193 = arith.addf %190, %192 : vector<64x64xf32>
    %194 = arith.truncf %1 : vector<64x32xf32> to vector<64x32xbf16>
    %c0_56 = arith.constant 0 : index
    %c0_57 = arith.constant 0 : index
    %195 = vector.load %arg8[%c0_56, %c0_57] : memref<32x64xbf16, #tpu.memory_space<vmem>>, vector<32x64xbf16>
    %cst_58 = arith.constant dense<0.000000e+00> : vector<64x64xf32>
    %196 = tpu.matmul %194, %195, %cst_58 {dimension_numbers = #tpu.dot_dimension_numbers<[1], [0], [0], [1], [0, 0, 1, 1], [], []>} : vector<64x32xbf16>, vector<32x64xbf16>, vector<64x64xf32> -> vector<64x64xf32>
    %197 = arith.addf %193, %196 : vector<64x64xf32>
    %198 = vector.extract_strided_slice %4 {offsets = [3, 0], sizes = [1, 64], strides = [1, 1]} : vector<4x64xf32> to vector<1x64xf32>
    %199 = vector.broadcast %198 : vector<1x64xf32> to vector<64x64xf32>
    %200 = arith.addf %197, %199 : vector<64x64xf32>
    %c0_59 = arith.constant 0 : index
    %c0_60 = arith.constant 0 : index
    %c0_61 = arith.constant 0 : index
    %201 = vector.load %arg9[%c0_59, %c0_60, %c0_61] : memref<1x64x64xf32, #tpu.memory_space<vmem>>, vector<1x64x64xf32>
    %202 = vector.shape_cast %201 : vector<1x64x64xf32> to vector<64x64xf32>
    %203 = vector.shape_cast %200 : vector<64x64xf32> to vector<1x64x64xf32>
    tpu.vector_store %arg9[%c0_59, %c0_60, %c0_61], %203 {strides = array<i32>} : memref<1x64x64xf32, #tpu.memory_space<vmem>>, vector<1x64x64xf32>,
    return
  }
  func.func @transform_0(%arg0: i32) -> (i32, i32, i32) {
    %c0_i32 = arith.constant 0 : i32
    %c0_i32_0 = arith.constant 0 : i32
    %c0_i32_1 = arith.constant 0 : i32
    return %arg0, %c0_i32, %c0_i32_0 : i32, i32, i32
  }
  func.func @transform_1(%arg0: i32) -> (i32, i32, i32) {
    %c0_i32 = arith.constant 0 : i32
    %c0_i32_0 = arith.constant 0 : i32
    %c0_i32_1 = arith.constant 0 : i32
    return %arg0, %c0_i32, %c0_i32_0 : i32, i32, i32
  }
  func.func @transform_2(%arg0: i32) -> (i32, i32) {
    %c0_i32 = arith.constant 0 : i32
    %c0_i32_0 = arith.constant 0 : i32
    %c0_i32_1 = arith.constant 0 : i32
    return %c0_i32, %c0_i32_0 : i32, i32
  }
  func.func @transform_3(%arg0: i32) -> (i32, i32) {
    %c0_i32 = arith.constant 0 : i32
    %c0_i32_0 = arith.constant 0 : i32
    %c0_i32_1 = arith.constant 0 : i32
    return %c0_i32, %c0_i32_0 : i32, i32
  }
  func.func @transform_4(%arg0: i32) -> (i32, i32) {
    %c0_i32 = arith.constant 0 : i32
    %c0_i32_0 = arith.constant 0 : i32
    %c0_i32_1 = arith.constant 0 : i32
    return %c0_i32, %c0_i32_0 : i32, i32
  }
  func.func @transform_5(%arg0: i32) -> (i32, i32) {
    %c0_i32 = arith.constant 0 : i32
    %c0_i32_0 = arith.constant 0 : i32
    %c0_i32_1 = arith.constant 0 : i32
    return %c0_i32, %c0_i32_0 : i32, i32
  }
  func.func @transform_6(%arg0: i32) -> (i32, i32) {
    %c0_i32 = arith.constant 0 : i32
    %c0_i32_0 = arith.constant 0 : i32
    %c0_i32_1 = arith.constant 0 : i32
    return %c0_i32, %c0_i32_0 : i32, i32
  }
  func.func @transform_7(%arg0: i32) -> (i32, i32) {
    %c0_i32 = arith.constant 0 : i32
    %c0_i32_0 = arith.constant 0 : i32
    %c0_i32_1 = arith.constant 0 : i32
    return %c0_i32, %c0_i32_0 : i32, i32
  }
  func.func @transform_8(%arg0: i32) -> (i32, i32, i32) {
    %c0_i32 = arith.constant 0 : i32
    %c0_i32_0 = arith.constant 0 : i32
    %c0_i32_1 = arith.constant 0 : i32
    return %arg0, %c0_i32, %c0_i32_0 : i32, i32, i32
  }
}

</mosaic_0001>

<llo_original>
// kernel: resblock_forward.1
$region0: #{resblock_forward.1}
  #allocation0 [shape = 'u32[]', space=smem, size = 0x4, offset = 0x4, fixed_abs, tag = 'smem constant byte address 0x4 - core index']
  #allocation1 [shape = 'u32[144,128]{1,0:T(1,128)}', space=vmem, size = 0x12000, scoped, tag = 'internal scratch']
  %s0 = inlined_call_operand.vmem [shape: f32[2,64,32], index: 0, kind: input, shape index: {}]
  %s1 = inlined_call_operand.vmem [shape: f32[2,1,64], index: 1, kind: input, shape index: {}]
  %s2 = inlined_call_operand.vmem [shape: f32[64,9], index: 2, kind: input, shape index: {}]
  %s3 = inlined_call_operand.vmem [shape: f32[2,32], index: 3, kind: input, shape index: {}]
  %s4 = inlined_call_operand.vmem [shape: f32[4,64], index: 4, kind: input, shape index: {}]
  %s5 = inlined_call_operand.vmem [shape: bf16[288,64], index: 5, kind: input, shape index: {}]
  %s6 = inlined_call_operand.vmem [shape: bf16[576,64], index: 6, kind: input, shape index: {}]
  %s7 = inlined_call_operand.vmem [shape: bf16[32,64], index: 7, kind: input, shape index: {}]
  %s8 = inlined_call_operand.hbm [shape: f32[2,64,64], index: 8, kind: output, shape index: {}]
  %s9 = sld [smem:[#allocation0]]
  $region65: #{resblock_forward.1} parent=0
    _
  %s11 = ssub.s32 1, %s9
  %s12 = scalar_select 0, %s11, %s9
  $region1: #{resblock_forward.1} parent=0
    #allocation2 [shape = 'u8[65536]{0}', space=vmem, size = 0x10000, scoped, tag = 'output window, operand 0']
    #allocation3 [shape = 's32[2]{0}', space=sflag, size = 0x8, scoped, tag = 'scoped memory for resblock_forward.1']
    %13 = vsyncpa [#allocation3], 0
    %s14 = scalar_lea.sflag [#allocation3], 1
    %15 = vsyncpa %s14, 0
    loop: start=0, step=1, limit=4
    $region2: #{resblock_forward.1} parent=1 // loop_pre_header
      _
    $region3: #{resblock_forward.1} parent=1 // loop_header
      %s17 = sphi 0, %s21
      %p18 = scmp.ge.s32.totalorder %s17, 4
      %s27 = sphi 0, %s29
      %s30 = sphi 0, %s27
      %s31 = sphi 0, %s30
      %s47 = sphi 0, %s31
      %s53 = sphi 0, %s55
      %s56 = sphi 0, %s53
      %s57 = sphi 0, %s56
      %s73 = sphi 0, %s57
      %s77 = sphi 0, %s77
      %s79 = sphi 0, %s77
      %s80 = sphi 0, %s79
      %s94 = sphi 0, %s80
      %s98 = sphi 0, %s98
      %s100 = sphi 0, %s98
      %s101 = sphi 0, %s100
      %s115 = sphi 0, %s101
      %s119 = sphi 0, %s119
      %s121 = sphi 0, %s119
      %s122 = sphi 0, %s121
      %s136 = sphi 0, %s122
      %s140 = sphi 0, %s140
      %s142 = sphi 0, %s140
      %s143 = sphi 0, %s142
      %s157 = sphi 0, %s143
      %s161 = sphi 0, %s161
      %s163 = sphi 0, %s161
      %s164 = sphi 0, %s163
      %s178 = sphi 0, %s164
      %s182 = sphi 0, %s182
      %s184 = sphi 0, %s182
      %s185 = sphi 0, %s184
      %s199 = sphi 0, %s185
      %s205 = sphi 0, %s207
      %s208 = sphi 0, %s205
      %s209 = sphi 0, %s208
      %s225 = sphi 0, %s209
    $region4: #{resblock_forward.1} parent=1 // loop_header_branch
      %20 = sbr.rel (%p18) target = $region8
    $region5: #{resblock_forward.1} parent=1 // loop_body
      %s22 = ssub.s32 %s17, 1
      %s23 = ssub.s32 %s17, 2
      %s24 = sadd.s32 %s17, 1
      %s25 = ssub.s32 %s17, %s24
      %p26 = scmp.eq.s32.totalorder %s25, 0
      %s28 = sadd.s32 %s27, 1
      %s29 = scalar_select %p26, %s27, %s28
      %p32 = pneg %p26
      %p33 = scmp.eq.s32.totalorder %s17, 1
      %p34 = por %p32, %p33
      %p35 = scmp.ne.s32.totalorder %s27, %s30
      %p36 = scmp.eq.s32.totalorder %s17, 0
      %p37 = por %p35, %p36
      %p38 = scmp.ne.s32.totalorder %s27, %s30
      %p39 = scmp.eq.s32.totalorder %s22, 1
      %p40 = por %p38, %p39
      %p41 = scmp.ne.s32.totalorder %s30, %s31
      %p42 = scmp.eq.s32.totalorder %s22, 0
      %p43 = por %p41, %p42
      %p44 = scmp.ne.s32.totalorder %s30, %s31
      %p45 = scmp.eq.s32.totalorder %s23, 1
      %p46 = por %p44, %p45
      %p48 = scmp.ne.s32.totalorder %s31, %s47
      %p49 = scmp.eq.s32.totalorder %s23, 0
      %p50 = por %p48, %p49
      %s51 = ssub.s32 %s17, %s24
      %p52 = scmp.eq.s32.totalorder %s51, 0
      %s54 = sadd.s32 %s53, 1
      %s55 = scalar_select %p52, %s53, %s54
      %p58 = pneg %p52
      %p59 = scmp.eq.s32.totalorder %s17, 1
      %p60 = por %p58, %p59
      %p61 = scmp.ne.s32.totalorder %s53, %s56
      %p62 = scmp.eq.s32.totalorder %s17, 0
      %p63 = por %p61, %p62
      %p64 = scmp.ne.s32.totalorder %s53, %s56
      %p65 = scmp.eq.s32.totalorder %s22, 1
      %p66 = por %p64, %p65
      %p67 = scmp.ne.s32.totalorder %s56, %s57
      %p68 = scmp.eq.s32.totalorder %s22, 0
      %p69 = por %p67, %p68
      %p70 = scmp.ne.s32.totalorder %s56, %s57
      %p71 = scmp.eq.s32.totalorder %s23, 1
      %p72 = por %p70, %p71
      %p74 = scmp.ne.s32.totalorder %s57, %s73
      %p75 = scmp.eq.s32.totalorder %s23, 0
      %p76 = por %p74, %p75
      %s78 = sadd.s32 %s77, 1
      %p81 = scmp.eq.s32.totalorder %s17, 1
      %p82 = scmp.ne.s32.totalorder %s77, %s79
      %p83 = scmp.eq.s32.totalorder %s17, 0
      %p84 = por %p82, %p83
      %p85 = scmp.ne.s32.totalorder %s77, %s79
      %p86 = scmp.eq.s32.totalorder %s22, 1
      %p87 = por %p85, %p86
      %p88 = scmp.ne.s32.totalorder %s79, %s80
      %p89 = scmp.eq.s32.totalorder %s22, 0
      %p90 = por %p88, %p89
      %p91 = scmp.ne.s32.totalorder %s79, %s80
      %p92 = scmp.eq.s32.totalorder %s23, 1
      %p93 = por %p91, %p92
      %p95 = scmp.ne.s32.totalorder %s80, %s94
      %p96 = scmp.eq.s32.totalorder %s23, 0
      %p97 = por %p95, %p96
      %s99 = sadd.s32 %s98, 1
      %p102 = scmp.eq.s32.totalorder %s17, 1
      %p103 = scmp.ne.s32.totalorder %s98, %s100
      %p104 = scmp.eq.s32.totalorder %s17, 0
      %p105 = por %p103, %p104
      %p106 = scmp.ne.s32.totalorder %s98, %s100
      %p107 = scmp.eq.s32.totalorder %s22, 1
      %p108 = por %p106, %p107
      %p109 = scmp.ne.s32.totalorder %s100, %s101
      %p110 = scmp.eq.s32.totalorder %s22, 0
      %p111 = por %p109, %p110
      %p112 = scmp.ne.s32.totalorder %s100, %s101
      %p113 = scmp.eq.s32.totalorder %s23, 1
      %p114 = por %p112, %p113
      %p116 = scmp.ne.s32.totalorder %s101, %s115
      %p117 = scmp.eq.s32.totalorder %s23, 0
      %p118 = por %p116, %p117
      %s120 = sadd.s32 %s119, 1
      %p123 = scmp.eq.s32.totalorder %s17, 1
      %p124 = scmp.ne.s32.totalorder %s119, %s121
      %p125 = scmp.eq.s32.totalorder %s17, 0
      %p126 = por %p124, %p125
      %p127 = scmp.ne.s32.totalorder %s119, %s121
      %p128 = scmp.eq.s32.totalorder %s22, 1
      %p129 = por %p127, %p128
      %p130 = scmp.ne.s32.totalorder %s121, %s122
      %p131 = scmp.eq.s32.totalorder %s22, 0
      %p132 = por %p130, %p131
      %p133 = scmp.ne.s32.totalorder %s121, %s122
      %p134 = scmp.eq.s32.totalorder %s23, 1
      %p135 = por %p133, %p134
      %p137 = scmp.ne.s32.totalorder %s122, %s136
      %p138 = scmp.eq.s32.totalorder %s23, 0
      %p139 = por %p137, %p138
      %s141 = sadd.s32 %s140, 1
      %p144 = scmp.eq.s32.totalorder %s17, 1
      %p145 = scmp.ne.s32.totalorder %s140, %s142
      %p146 = scmp.eq.s32.totalorder %s17, 0
      %p147 = por %p145, %p146
      %p148 = scmp.ne.s32.totalorder %s140, %s142
      %p149 = scmp.eq.s32.totalorder %s22, 1
      %p150 = por %p148, %p149
      %p151 = scmp.ne.s32.totalorder %s142, %s143
      %p152 = scmp.eq.s32.totalorder %s22, 0
      %p153 = por %p151, %p152
      %p154 = scmp.ne.s32.totalorder %s142, %s143
      %p155 = scmp.eq.s32.totalorder %s23, 1
      %p156 = por %p154, %p155
      %p158 = scmp.ne.s32.totalorder %s143, %s157
      %p159 = scmp.eq.s32.totalorder %s23, 0
      %p160 = por %p158, %p159
      %s162 = sadd.s32 %s161, 1
      %p165 = scmp.eq.s32.totalorder %s17, 1
      %p166 = scmp.ne.s32.totalorder %s161, %s163
      %p167 = scmp.eq.s32.totalorder %s17, 0
      %p168 = por %p166, %p167
      %p169 = scmp.ne.s32.totalorder %s161, %s163
      %p170 = scmp.eq.s32.totalorder %s22, 1
      %p171 = por %p169, %p170
      %p172 = scmp.ne.s32.totalorder %s163, %s164
      %p173 = scmp.eq.s32.totalorder %s22, 0
      %p174 = por %p172, %p173
      %p175 = scmp.ne.s32.totalorder %s163, %s164
      %p176 = scmp.eq.s32.totalorder %s23, 1
      %p177 = por %p175, %p176
      %p179 = scmp.ne.s32.totalorder %s164, %s178
      %p180 = scmp.eq.s32.totalorder %s23, 0
      %p181 = por %p179, %p180
      %s183 = sadd.s32 %s182, 1
      %p186 = scmp.eq.s32.totalorder %s17, 1
      %p187 = scmp.ne.s32.totalorder %s182, %s184
      %p188 = scmp.eq.s32.totalorder %s17, 0
      %p189 = por %p187, %p188
      %p190 = scmp.ne.s32.totalorder %s182, %s184
      %p191 = scmp.eq.s32.totalorder %s22, 1
      %p192 = por %p190, %p191
      %p193 = scmp.ne.s32.totalorder %s184, %s185
      %p194 = scmp.eq.s32.totalorder %s22, 0
      %p195 = por %p193, %p194
      %p196 = scmp.ne.s32.totalorder %s184, %s185
      %p197 = scmp.eq.s32.totalorder %s23, 1
      %p198 = por %p196, %p197
      %p200 = scmp.ne.s32.totalorder %s185, %s199
      %p201 = scmp.eq.s32.totalorder %s23, 0
      %p202 = por %p200, %p201
      %s203 = ssub.s32 %s17, %s24
      %p204 = scmp.eq.s32.totalorder %s203, 0
      %s206 = sadd.s32 %s205, 1
      %s207 = scalar_select %p204, %s205, %s206
      %p210 = pneg %p204
      %p211 = scmp.eq.s32.totalorder %s17, 1
      %p212 = por %p210, %p211
      %p213 = scmp.ne.s32.totalorder %s205, %s208
      %p214 = scmp.eq.s32.totalorder %s17, 0
      %p215 = por %p213, %p214
      %p216 = scmp.ne.s32.totalorder %s205, %s208
      %p217 = scmp.eq.s32.totalorder %s22, 1
      %p218 = por %p216, %p217
      %p219 = scmp.ne.s32.totalorder %s208, %s209
      %p220 = scmp.eq.s32.totalorder %s22, 0
      %p221 = por %p219, %p220
      %p222 = scmp.ne.s32.totalorder %s208, %s209
      %p223 = scmp.eq.s32.totalorder %s23, 1
      %p224 = por %p222, %p223
      %p226 = scmp.ne.s32.totalorder %s209, %s225
      %p227 = scmp.eq.s32.totalorder %s23, 0
      %p228 = por %p226, %p227
      %p229 = scmp.le.s32.totalorder 1, %s17
      %p230 = scmp.lt.s32.totalorder %s17, 3
      %p231 = pnand %p229, %p230
      %p232 = pneg %p231
      // Predicated region
      $region9: #{resblock_forward.1} parent=5 // pred_check
        _
      $region10: #{resblock_forward.1} parent=5 // pred_check_branch
        %234 = sbr.rel (%p231) target = $region12
      $region11: #{resblock_forward.1} parent=5 // pred_region
        %s235 = ssub.s32 %s17, 1
        // Predicated region
        $region13: #{resblock_forward.1} parent=11 // pred_check
          %p236 = pneg %p90
        $region14: #{resblock_forward.1} parent=11 // pred_check_branch
          %238 = sbr.rel (%p236) target = $region16
        $region15: #{resblock_forward.1} parent=11 // pred_region
          _
        $region16: #{resblock_forward.1} parent=11 // pred_fallthru
          _
        // Predicated region
        $region17: #{resblock_forward.1} parent=11 // pred_check
          %p239 = pneg %p111
        $region18: #{resblock_forward.1} parent=11 // pred_check_branch
          %241 = sbr.rel (%p239) target = $region20
        $region19: #{resblock_forward.1} parent=11 // pred_region
          _
        $region20: #{resblock_forward.1} parent=11 // pred_fallthru
          _
        // Predicated region
        $region21: #{resblock_forward.1} parent=11 // pred_check
          %p242 = pneg %p132
        $region22: #{resblock_forward.1} parent=11 // pred_check_branch
          %244 = sbr.rel (%p242) target = $region24
        $region23: #{resblock_forward.1} parent=11 // pred_region
          _
        $region24: #{resblock_forward.1} parent=11 // pred_fallthru
          _
        // Predicated region
        $region25: #{resblock_forward.1} parent=11 // pred_check
          %p245 = pneg %p153
        $region26: #{resblock_forward.1} parent=11 // pred_check_branch
          %247 = sbr.rel (%p245) target = $region28
        $region27: #{resblock_forward.1} parent=11 // pred_region
          _
        $region28: #{resblock_forward.1} parent=11 // pred_fallthru
          _
        // Predicated region
        $region29: #{resblock_forward.1} parent=11 // pred_check
          %p248 = pneg %p174
        $region30: #{resblock_forward.1} parent=11 // pred_check_branch
          %250 = sbr.rel (%p248) target = $region32
        $region31: #{resblock_forward.1} parent=11 // pred_region
          _
        $region32: #{resblock_forward.1} parent=11 // pred_fallthru
          _
        // Predicated region
        $region33: #{resblock_forward.1} parent=11 // pred_check
          %p251 = pneg %p195
        $region34: #{resblock_forward.1} parent=11 // pred_check_branch
          %253 = sbr.rel (%p251) target = $region36
        $region35: #{resblock_forward.1} parent=11 // pred_region
          _
        $region36: #{resblock_forward.1} parent=11 // pred_fallthru
          _
      $region12: #{resblock_forward.1} parent=5 // pred_fallthru
        _
      %p254 = scmp.lt.s32.totalorder %s17, 2
      // Predicated region
      $region37: #{resblock_forward.1} parent=5 // pred_check
        %p255 = pneg %p254
      $region38: #{resblock_forward.1} parent=5 // pred_check_branch
        %257 = sbr.rel (%p255) target = $region40
      $region39: #{resblock_forward.1} parent=5 // pred_region
        // Predicated region
        $region41: #{resblock_forward.1} parent=39 // pred_check
          %p258 = pneg %p37
        $region42: #{resblock_forward.1} parent=39 // pred_check_branch
          %260 = sbr.rel (%p258) target = $region44
        $region43: #{resblock_forward.1} parent=39 // pred_region
          %p261 = scmp.lt.s32.totalorder %s17, 1
          %s262 = scalar_select %p261, %s17, 1
          %s263 = smul.addr %s262, 8
          %s264 = smul.addr %s263, 8
          %s265 = scalar_lea.vmem %s0, %s264
        $region44: #{resblock_forward.1} parent=39 // pred_fallthru
          _
        // Predicated region
        $region45: #{resblock_forward.1} parent=39 // pred_check
          %p266 = pneg %p63
        $region46: #{resblock_forward.1} parent=39 // pred_check_branch
          %268 = sbr.rel (%p266) target = $region48
        $region47: #{resblock_forward.1} parent=39 // pred_region
          %p269 = scmp.lt.s32.totalorder %s17, 1
          %s270 = scalar_select %p269, %s17, 1
          %s271 = scalar_lea.vmem %s1, %s270
        $region48: #{resblock_forward.1} parent=39 // pred_fallthru
          _
      $region40: #{resblock_forward.1} parent=5 // pred_fallthru
        _
      %p272 = scmp.le.s32.totalorder 1, %s17
      %p273 = scmp.lt.s32.totalorder %s17, 3
      %p274 = pnand %p272, %p273
      %p275 = pneg %p274
      // Predicated region
      $region49: #{resblock_forward.1} parent=5 // pred_check
        _
      $region50: #{resblock_forward.1} parent=5 // pred_check_branch
        %277 = sbr.rel (%p274) target = $region52
      $region51: #{resblock_forward.1} parent=5 // pred_region
        %s278 = ssub.s32 %s17, 1
        %p279 = scmp.lt.s32.totalorder %s22, 1
        %s280 = scalar_select %p279, %s22, 1
        %s281 = smul.addr %s280, 8
        %s282 = smul.addr %s281, 8
        %s283 = scalar_lea.vmem %s0, %s282
        %p284 = pneg %p43
        %p285 = pneg %p40
        %p286 = scmp.lt.s32.totalorder %s22, 1
        %s287 = scalar_select %p286, %s22, 1
        %s288 = scalar_lea.vmem %s1, %s287
        %p289 = pneg %p69
        %p290 = pneg %p66
        %p291 = pneg %p90
        %p292 = pneg %p87
        %p293 = pneg %p111
        %p294 = pneg %p108
        %p295 = pneg %p132
        %p296 = pneg %p129
        %p297 = pneg %p153
        %p298 = pneg %p150
        %p299 = pneg %p174
        %p300 = pneg %p171
        %p301 = pneg %p195
        %p302 = pneg %p192
        %p303 = pneg %p221
        %p304 = pneg %p218
        %s305 = sand.u32 %s208, 1
        %s306 = scalar_lea.sflag [#allocation3], %s305
        %s307 = sand.u32 %s208, 1
        %s308 = smul.addr %s307, 64
        %s309 = scalar_lea.vmem [#allocation2], %s308
        %p310 = scmp.lt.s32.totalorder %s22, 1
        %s311 = scalar_select %p310, %s22, 1
        %s312 = smul.addr %s311, 8
        %s313 = smul.addr %s312, 8
        %s314 = scalar_lea.vmem %s0, %s313
        %p315 = scmp.lt.s32.totalorder %s22, 1
        %s316 = scalar_select %p315, %s22, 1
        %s317 = scalar_lea.vmem %s1, %s316
        %v319 = vld [vmem:[%s314] sm:$0xff]
        %v320 = vld [vmem:[%s314 + $0x8] sm:$0xff]
        %v321 = vld [vmem:[%s314 + $0x10] sm:$0xff]
        %v322 = vld [vmem:[%s314 + $0x18] sm:$0xff]
        %v323 = vld [vmem:[%s314 + $0x20] sm:$0xff]
        %v324 = vld [vmem:[%s314 + $0x28] sm:$0xff]
        %v325 = vld [vmem:[%s314 + $0x30] sm:$0xff]
        %v326 = vld [vmem:[%s314 + $0x38] sm:$0xff]
        %v327 = vld [vmem:[%s2] sm:$0xff]
        %v328 = vld [vmem:[%s2 + $0x8] sm:$0xff]
        %v329 = vld [vmem:[%s2 + $0x10] sm:$0xff]
        %v330 = vld [vmem:[%s2 + $0x18] sm:$0xff]
        %v331 = vld [vmem:[%s2 + $0x20] sm:$0xff]
        %v332 = vld [vmem:[%s2 + $0x28] sm:$0xff]
        %v333 = vld [vmem:[%s2 + $0x30] sm:$0xff]
        %v334 = vld [vmem:[%s2 + $0x38] sm:$0xff]
        %v335 = vld [vmem:[%s3] sm:$0x3]
        %v336 = vld [vmem:[%s4] sm:$0xf]
        %vm337 = vcmask 261120
        %v338 = vsel %vm337, %v319, 0.0
        %v339 = vsel %vm337, %v320, 0.0
        %v340 = vadd.f32 %v338, %v339
        %v341 = vsel %vm337, %v321, 0.0
        %v342 = vadd.f32 %v340, %v341
        %v343 = vsel %vm337, %v322, 0.0
        %v344 = vadd.f32 %v342, %v343
        %v345 = vsel %vm337, %v323, 0.0
        %v346 = vadd.f32 %v344, %v345
        %v347 = vsel %vm337, %v324, 0.0
        %v348 = vadd.f32 %v346, %v347
        %v349 = vsel %vm337, %v325, 0.0
        %v350 = vadd.f32 %v348, %v349
        %v351 = vsel %vm337, %v326, 0.0
        %v352 = vadd.f32 %v350, %v351
        %v353 = vrot.slane %v352, 4
        %v354 = vadd.f32 %v352, %v353
        %v355 = vrot.slane %v354, 2
        %v356 = vadd.f32 %v354, %v355
        %v357 = vrot.slane %v356, 1
        %v358 = vadd.f32 %v356, %v357
        %v359 = vmul.f32 %v358, 0.015625
        %v360 = vsub.f32 %v319, %v359
        %v361 = vsub.f32 %v320, %v359
        %v362 = vsub.f32 %v321, %v359
        %v363 = vsub.f32 %v322, %v359
        %v364 = vsub.f32 %v323, %v359
        %v365 = vsub.f32 %v324, %v359
        %v366 = vsub.f32 %v325, %v359
        %v367 = vsub.f32 %v326, %v359
        %v368 = vmul.f32 %v360, %v360
        %v369 = vmul.f32 %v361, %v361
        %v370 = vmul.f32 %v362, %v362
        %v371 = vmul.f32 %v363, %v363
        %v372 = vmul.f32 %v364, %v364
        %v373 = vmul.f32 %v365, %v365
        %v374 = vmul.f32 %v366, %v366
        %v375 = vmul.f32 %v367, %v367
        %v376 = vsel %vm337, %v368, 0.0
        %v377 = vsel %vm337, %v369, 0.0
        %v378 = vadd.f32 %v376, %v377
        %v379 = vsel %vm337, %v370, 0.0
        %v380 = vadd.f32 %v378, %v379
        %v381 = vsel %vm337, %v371, 0.0
        %v382 = vadd.f32 %v380, %v381
        %v383 = vsel %vm337, %v372, 0.0
        %v384 = vadd.f32 %v382, %v383
        %v385 = vsel %vm337, %v373, 0.0
        %v386 = vadd.f32 %v384, %v385
        %v387 = vsel %vm337, %v374, 0.0
        %v388 = vadd.f32 %v386, %v387
        %v389 = vsel %vm337, %v375, 0.0
        %v390 = vadd.f32 %v388, %v389
        %v391 = vrot.slane %v390, 4
        %v392 = vadd.f32 %v390, %v391
        %v393 = vrot.slane %v392, 2
        %v394 = vadd.f32 %v392, %v393
        %v395 = vrot.slane %v394, 1
        %v396 = vadd.f32 %v394, %v395
        %v397 = vmul.f32 %v396, 0.015625
        %v398 = vadd.f32 %v397, 1e-05
        %v399 = vrsqrt.pop %v398
        %v400 = vmul.f32 %v360, %v399
        %v401 = vmul.f32 %v361, %v399
        %v402 = vmul.f32 %v362, %v399
        %v403 = vmul.f32 %v363, %v399
        %v404 = vmul.f32 %v364, %v399
        %v405 = vmul.f32 %v365, %v399
        %v406 = vmul.f32 %v366, %v399
        %v407 = vmul.f32 %v367, %v399
        %v408 = vlaneseq
        %v409 = vshrl.u32 %v408, 7
        %v410 = vsub.s32 0, %v409
        %v411 = vrot.slane %v335, %v410
        %v412 = vmul.f32 %v400, %v411
        %v413 = vmul.f32 %v401, %v411
        %v414 = vmul.f32 %v402, %v411
        %v415 = vmul.f32 %v403, %v411
        %v416 = vmul.f32 %v404, %v411
        %v417 = vmul.f32 %v405, %v411
        %v418 = vmul.f32 %v406, %v411
        %v419 = vmul.f32 %v407, %v411
        %v420 = vlaneseq
        %v421 = vshrl.u32 %v420, 7
        %v422 = vsub.s32 1, %v421
        %v423 = vrot.slane %v335, %v422
        %v424 = vadd.f32 %v412, %v423
        %v425 = vadd.f32 %v413, %v423
        %v426 = vadd.f32 %v414, %v423
        %v427 = vadd.f32 %v415, %v423
        %v428 = vadd.f32 %v416, %v423
        %v429 = vadd.f32 %v417, %v423
        %v430 = vadd.f32 %v418, %v423
        %v431 = vadd.f32 %v419, %v423
        %v432 = vxor.u32 %v424, 2147483648
        %v433 = vxor.u32 %v425, 2147483648
        %v434 = vxor.u32 %v426, 2147483648
        %v435 = vxor.u32 %v427, 2147483648
        %v436 = vxor.u32 %v428, 2147483648
        %v437 = vxor.u32 %v429, 2147483648
        %v438 = vxor.u32 %v430, 2147483648
        %v439 = vxor.u32 %v431, 2147483648
        %v440 = vmul.f32 %v432, 1.442695
        %v441 = vpow.pop %v440
        %v442 = vmul.f32 %v433, 1.442695
        %v443 = vpow.pop %v442
        %v444 = vmul.f32 %v434, 1.442695
        %v445 = vpow.pop %v444
        %v446 = vmul.f32 %v435, 1.442695
        %v447 = vpow.pop %v446
        %v448 = vmul.f32 %v436, 1.442695
        %v449 = vpow.pop %v448
        %v450 = vmul.f32 %v437, 1.442695
        %v451 = vpow.pop %v450
        %v452 = vmul.f32 %v438, 1.442695
        %v453 = vpow.pop %v452
        %v454 = vmul.f32 %v439, 1.442695
        %v455 = vpow.pop %v454
        %v456 = vadd.f32 %v441, 1.0
        %v457 = vadd.f32 %v443, 1.0
        %v458 = vadd.f32 %v445, 1.0
        %v459 = vadd.f32 %v447, 1.0
        %v460 = vadd.f32 %v449, 1.0
        %v461 = vadd.f32 %v451, 1.0
        %v462 = vadd.f32 %v453, 1.0
        %v463 = vadd.f32 %v455, 1.0
        %v464 = vrcp.pop %v456
        %v465 = vmul.f32 1.0, %v464
        %v466 = vrcp.pop %v457
        %v467 = vmul.f32 1.0, %v466
        %v468 = vrcp.pop %v458
        %v469 = vmul.f32 1.0, %v468
        %v470 = vrcp.pop %v459
        %v471 = vmul.f32 1.0, %v470
        %v472 = vrcp.pop %v460
        %v473 = vmul.f32 1.0, %v472
        %v474 = vrcp.pop %v461
        %v475 = vmul.f32 1.0, %v474
        %v476 = vrcp.pop %v462
        %v477 = vmul.f32 1.0, %v476
        %v478 = vrcp.pop %v463
        %v479 = vmul.f32 1.0, %v478
        %v480 = vmul.f32 %v424, %v465
        %v481 = vmul.f32 %v425, %v467
        %v482 = vmul.f32 %v426, %v469
        %v483 = vmul.f32 %v427, %v471
        %v484 = vmul.f32 %v428, %v473
        %v485 = vmul.f32 %v429, %v475
        %v486 = vmul.f32 %v430, %v477
        %v487 = vmul.f32 %v431, %v479
        %v488 = vrot.slane %v480, 7
        %v489 = vrot.slane %v481, 7
        %v490 = vrot.slane %v482, 7
        %v491 = vrot.slane %v483, 7
        %v492 = vrot.slane %v484, 7
        %v493 = vrot.slane %v485, 7
        %v494 = vrot.slane %v486, 7
        %v495 = vrot.slane %v487, 7
        %v496 = vlaneseq
        %v497 = vshrl.u32 %v496, 7
        %vm498 = vcmp.lt.s32.totalorder %v497, 1
        %v499 = vsel %vm498, %v494, %v495
        %v500 = vsel %vm498, %v493, %v494
        %v501 = vsel %vm498, %v492, %v493
        %v502 = vsel %vm498, %v491, %v492
        %v503 = vsel %vm498, %v490, %v491
        %v504 = vsel %vm498, %v489, %v490
        %v505 = vsel %vm498, %v488, %v489
        %v506 = vsel %vm498, %v495, %v488
        %508 = vset.pattern.permute.xlu0 0
        %509 = vperm.xlu0 %508, %v327
        %v510 = vpop.permute.xlu0 %509
        %513 = vset.pattern.permute.xlu0 0
        %514 = vperm.xlu0 %513, %v328
        %v515 = vpop.permute.xlu0 %514
        %518 = vset.pattern.permute.xlu0 0
        %519 = vperm.xlu0 %518, %v329
        %v520 = vpop.permute.xlu0 %519
        %523 = vset.pattern.permute.xlu0 0
        %524 = vperm.xlu0 %523, %v330
        %v525 = vpop.permute.xlu0 %524
        %528 = vset.pattern.permute.xlu0 0
        %529 = vperm.xlu0 %528, %v331
        %v530 = vpop.permute.xlu0 %529
        %533 = vset.pattern.permute.xlu0 0
        %534 = vperm.xlu0 %533, %v332
        %v535 = vpop.permute.xlu0 %534
        %538 = vset.pattern.permute.xlu0 0
        %539 = vperm.xlu0 %538, %v333
        %v540 = vpop.permute.xlu0 %539
        %543 = vset.pattern.permute.xlu0 0
        %544 = vperm.xlu0 %543, %v334
        %v545 = vpop.permute.xlu0 %544
        %v547 = vmul.f32 %v499, %v510
        %v548 = vmul.f32 %v506, %v515
        %v549 = vmul.f32 %v505, %v520
        %v550 = vmul.f32 %v504, %v525
        %v551 = vmul.f32 %v503, %v530
        %v552 = vmul.f32 %v502, %v535
        %v553 = vmul.f32 %v501, %v540
        %v554 = vmul.f32 %v500, %v545
        %555 = vset.pattern.permute.xlu0 1
        %556 = vperm.xlu0 %555, %v327
        %v557 = vpop.permute.xlu0 %556
        %559 = vset.pattern.permute.xlu0 1
        %560 = vperm.xlu0 %559, %v328
        %v561 = vpop.permute.xlu0 %560
        %563 = vset.pattern.permute.xlu0 1
        %564 = vperm.xlu0 %563, %v329
        %v565 = vpop.permute.xlu0 %564
        %567 = vset.pattern.permute.xlu0 1
        %568 = vperm.xlu0 %567, %v330
        %v569 = vpop.permute.xlu0 %568
        %571 = vset.pattern.permute.xlu0 1
        %572 = vperm.xlu0 %571, %v331
        %v573 = vpop.permute.xlu0 %572
        %575 = vset.pattern.permute.xlu0 1
        %576 = vperm.xlu0 %575, %v332
        %v577 = vpop.permute.xlu0 %576
        %579 = vset.pattern.permute.xlu0 1
        %580 = vperm.xlu0 %579, %v333
        %v581 = vpop.permute.xlu0 %580
        %583 = vset.pattern.permute.xlu0 1
        %584 = vperm.xlu0 %583, %v334
        %v585 = vpop.permute.xlu0 %584
        %v587 = vmul.f32 %v487, %v557
        %v588 = vmul.f32 %v480, %v561
        %v589 = vmul.f32 %v481, %v565
        %v590 = vmul.f32 %v482, %v569
        %v591 = vmul.f32 %v483, %v573
        %v592 = vmul.f32 %v484, %v577
        %v593 = vmul.f32 %v485, %v581
        %v594 = vmul.f32 %v486, %v585
        %v595 = vrot.slane %v480, 1
        %v596 = vrot.slane %v481, 1
        %v597 = vrot.slane %v482, 1
        %v598 = vrot.slane %v483, 1
        %v599 = vrot.slane %v484, 1
        %v600 = vrot.slane %v485, 1
        %v601 = vrot.slane %v486, 1
        %v602 = vrot.slane %v487, 1
        %vm603 = vcmp.lt.s32.totalorder %v497, 7
        %v604 = vsel %vm603, %v601, %v602
        %v605 = vsel %vm603, %v600, %v601
        %v606 = vsel %vm603, %v599, %v600
        %v607 = vsel %vm603, %v598, %v599
        %v608 = vsel %vm603, %v597, %v598
        %v609 = vsel %vm603, %v596, %v597
        %v610 = vsel %vm603, %v595, %v596
        %v611 = vsel %vm603, %v602, %v595
        %612 = vset.pattern.permute.xlu0 2
        %613 = vperm.xlu0 %612, %v327
        %v614 = vpop.permute.xlu0 %613
        %616 = vset.pattern.permute.xlu0 2
        %617 = vperm.xlu0 %616, %v328
        %v618 = vpop.permute.xlu0 %617
        %620 = vset.pattern.permute.xlu0 2
        %621 = vperm.xlu0 %620, %v329
        %v622 = vpop.permute.xlu0 %621
        %624 = vset.pattern.permute.xlu0 2
        %625 = vperm.xlu0 %624, %v330
        %v626 = vpop.permute.xlu0 %625
        %628 = vset.pattern.permute.xlu0 2
        %629 = vperm.xlu0 %628, %v331
        %v630 = vpop.permute.xlu0 %629
        %632 = vset.pattern.permute.xlu0 2
        %633 = vperm.xlu0 %632, %v332
        %v634 = vpop.permute.xlu0 %633
        %636 = vset.pattern.permute.xlu0 2
        %637 = vperm.xlu0 %636, %v333
        %v638 = vpop.permute.xlu0 %637
        %640 = vset.pattern.permute.xlu0 2
        %641 = vperm.xlu0 %640, %v334
        %v642 = vpop.permute.xlu0 %641
        %v644 = vmul.f32 %v611, %v614
        %v645 = vmul.f32 %v610, %v618
        %v646 = vmul.f32 %v609, %v622
        %v647 = vmul.f32 %v608, %v626
        %v648 = vmul.f32 %v607, %v630
        %v649 = vmul.f32 %v606, %v634
        %v650 = vmul.f32 %v605, %v638
        %v651 = vmul.f32 %v604, %v642
        %652 = vset.pattern.permute.xlu0 3
        %653 = vperm.xlu0 %652, %v327
        %v654 = vpop.permute.xlu0 %653
        %656 = vset.pattern.permute.xlu0 3
        %657 = vperm.xlu0 %656, %v328
        %v658 = vpop.permute.xlu0 %657
        %660 = vset.pattern.permute.xlu0 3
        %661 = vperm.xlu0 %660, %v329
        %v662 = vpop.permute.xlu0 %661
        %664 = vset.pattern.permute.xlu0 3
        %665 = vperm.xlu0 %664, %v330
        %v666 = vpop.permute.xlu0 %665
        %668 = vset.pattern.permute.xlu0 3
        %669 = vperm.xlu0 %668, %v331
        %v670 = vpop.permute.xlu0 %669
        %672 = vset.pattern.permute.xlu0 3
        %673 = vperm.xlu0 %672, %v332
        %v674 = vpop.permute.xlu0 %673
        %676 = vset.pattern.permute.xlu0 3
        %677 = vperm.xlu0 %676, %v333
        %v678 = vpop.permute.xlu0 %677
        %680 = vset.pattern.permute.xlu0 3
        %681 = vperm.xlu0 %680, %v334
        %v682 = vpop.permute.xlu0 %681
        %v684 = vmul.f32 %v506, %v654
        %v685 = vmul.f32 %v505, %v658
        %v686 = vmul.f32 %v504, %v662
        %v687 = vmul.f32 %v503, %v666
        %v688 = vmul.f32 %v502, %v670
        %v689 = vmul.f32 %v501, %v674
        %v690 = vmul.f32 %v500, %v678
        %v691 = vmul.f32 %v499, %v682
        %692 = vset.pattern.permute.xlu0 5
        %693 = vperm.xlu0 %692, %v327
        %v694 = vpop.permute.xlu0 %693
        %696 = vset.pattern.permute.xlu0 5
        %697 = vperm.xlu0 %696, %v328
        %v698 = vpop.permute.xlu0 %697
        %700 = vset.pattern.permute.xlu0 5
        %701 = vperm.xlu0 %700, %v329
        %v702 = vpop.permute.xlu0 %701
        %704 = vset.pattern.permute.xlu0 5
        %705 = vperm.xlu0 %704, %v330
        %v706 = vpop.permute.xlu0 %705
        %708 = vset.pattern.permute.xlu0 5
        %709 = vperm.xlu0 %708, %v331
        %v710 = vpop.permute.xlu0 %709
        %712 = vset.pattern.permute.xlu0 5
        %713 = vperm.xlu0 %712, %v332
        %v714 = vpop.permute.xlu0 %713
        %716 = vset.pattern.permute.xlu0 5
        %717 = vperm.xlu0 %716, %v333
        %v718 = vpop.permute.xlu0 %717
        %720 = vset.pattern.permute.xlu0 5
        %721 = vperm.xlu0 %720, %v334
        %v722 = vpop.permute.xlu0 %721
        %v724 = vmul.f32 %v610, %v694
        %v725 = vmul.f32 %v609, %v698
        %v726 = vmul.f32 %v608, %v702
        %v727 = vmul.f32 %v607, %v706
        %v728 = vmul.f32 %v606, %v710
        %v729 = vmul.f32 %v605, %v714
        %v730 = vmul.f32 %v604, %v718
        %v731 = vmul.f32 %v611, %v722
        %732 = vset.pattern.permute.xlu0 6
        %733 = vperm.xlu0 %732, %v327
        %v734 = vpop.permute.xlu0 %733
        %736 = vset.pattern.permute.xlu0 6
        %737 = vperm.xlu0 %736, %v328
        %v738 = vpop.permute.xlu0 %737
        %740 = vset.pattern.permute.xlu0 6
        %741 = vperm.xlu0 %740, %v329
        %v742 = vpop.permute.xlu0 %741
        %744 = vset.pattern.permute.xlu0 6
        %745 = vperm.xlu0 %744, %v330
        %v746 = vpop.permute.xlu0 %745
        %748 = vset.pattern.permute.xlu0 6
        %749 = vperm.xlu0 %748, %v331
        %v750 = vpop.permute.xlu0 %749
        %752 = vset.pattern.permute.xlu0 6
        %753 = vperm.xlu0 %752, %v332
        %v754 = vpop.permute.xlu0 %753
        %756 = vset.pattern.permute.xlu0 6
        %757 = vperm.xlu0 %756, %v333
        %v758 = vpop.permute.xlu0 %757
        %760 = vset.pattern.permute.xlu0 6
        %761 = vperm.xlu0 %760, %v334
        %v762 = vpop.permute.xlu0 %761
        %v764 = vmul.f32 %v505, %v734
        %v765 = vmul.f32 %v504, %v738
        %v766 = vmul.f32 %v503, %v742
        %v767 = vmul.f32 %v502, %v746
        %v768 = vmul.f32 %v501, %v750
        %v769 = vmul.f32 %v500, %v754
        %v770 = vmul.f32 %v499, %v758
        %v771 = vmul.f32 %v506, %v762
        %772 = vset.pattern.permute.xlu0 7
        %773 = vperm.xlu0 %772, %v327
        %v774 = vpop.permute.xlu0 %773
        %776 = vset.pattern.permute.xlu0 7
        %777 = vperm.xlu0 %776, %v328
        %v778 = vpop.permute.xlu0 %777
        %780 = vset.pattern.permute.xlu0 7
        %781 = vperm.xlu0 %780, %v329
        %v782 = vpop.permute.xlu0 %781
        %784 = vset.pattern.permute.xlu0 7
        %785 = vperm.xlu0 %784, %v330
        %v786 = vpop.permute.xlu0 %785
        %788 = vset.pattern.permute.xlu0 7
        %789 = vperm.xlu0 %788, %v331
        %v790 = vpop.permute.xlu0 %789
        %792 = vset.pattern.permute.xlu0 7
        %793 = vperm.xlu0 %792, %v332
        %v794 = vpop.permute.xlu0 %793
        %796 = vset.pattern.permute.xlu0 7
        %797 = vperm.xlu0 %796, %v333
        %v798 = vpop.permute.xlu0 %797
        %800 = vset.pattern.permute.xlu0 7
        %801 = vperm.xlu0 %800, %v334
        %v802 = vpop.permute.xlu0 %801
        %v804 = vmul.f32 %v481, %v774
        %v805 = vmul.f32 %v482, %v778
        %v806 = vmul.f32 %v483, %v782
        %v807 = vmul.f32 %v484, %v786
        %v808 = vmul.f32 %v485, %v790
        %v809 = vmul.f32 %v486, %v794
        %v810 = vmul.f32 %v487, %v798
        %v811 = vmul.f32 %v480, %v802
        %812 = vset.pattern.permute.xlu0 8
        %813 = vperm.xlu0 %812, %v327
        %v814 = vpop.permute.xlu0 %813
        %816 = vset.pattern.permute.xlu0 8
        %817 = vperm.xlu0 %816, %v328
        %v818 = vpop.permute.xlu0 %817
        %820 = vset.pattern.permute.xlu0 8
        %821 = vperm.xlu0 %820, %v329
        %v822 = vpop.permute.xlu0 %821
        %824 = vset.pattern.permute.xlu0 8
        %825 = vperm.xlu0 %824, %v330
        %v826 = vpop.permute.xlu0 %825
        %828 = vset.pattern.permute.xlu0 8
        %829 = vperm.xlu0 %828, %v331
        %v830 = vpop.permute.xlu0 %829
        %832 = vset.pattern.permute.xlu0 8
        %833 = vperm.xlu0 %832, %v332
        %v834 = vpop.permute.xlu0 %833
        %836 = vset.pattern.permute.xlu0 8
        %837 = vperm.xlu0 %836, %v333
        %v838 = vpop.permute.xlu0 %837
        %840 = vset.pattern.permute.xlu0 8
        %841 = vperm.xlu0 %840, %v334
        %v842 = vpop.permute.xlu0 %841
        %v844 = vmul.f32 %v609, %v814
        %v845 = vmul.f32 %v608, %v818
        %v846 = vmul.f32 %v607, %v822
        %v847 = vmul.f32 %v606, %v826
        %v848 = vmul.f32 %v605, %v830
        %v849 = vmul.f32 %v604, %v834
        %v850 = vmul.f32 %v611, %v838
        %v851 = vmul.f32 %v610, %v842
        %860 = vrot.lane.b32.xlu0 %v587, 32
        %v861 = vpop.permute.xlu0 %860
        %862 = vrot.lane.b32.xlu0 %v588, 32
        %v863 = vpop.permute.xlu0 %862
        %864 = vrot.lane.b32.xlu0 %v589, 32
        %v865 = vpop.permute.xlu0 %864
        %866 = vrot.lane.b32.xlu0 %v590, 32
        %v867 = vpop.permute.xlu0 %866
        %868 = vrot.lane.b32.xlu0 %v591, 32
        %v869 = vpop.permute.xlu0 %868
        %870 = vrot.lane.b32.xlu0 %v592, 32
        %v871 = vpop.permute.xlu0 %870
        %872 = vrot.lane.b32.xlu0 %v593, 32
        %v873 = vpop.permute.xlu0 %872
        %874 = vrot.lane.b32.xlu0 %v594, 32
        %v875 = vpop.permute.xlu0 %874
        %892 = vrot.lane.b32.xlu0 %v644, 64
        %v893 = vpop.permute.xlu0 %892
        %894 = vrot.lane.b32.xlu0 %v645, 64
        %v895 = vpop.permute.xlu0 %894
        %896 = vrot.lane.b32.xlu0 %v646, 64
        %v897 = vpop.permute.xlu0 %896
        %898 = vrot.lane.b32.xlu0 %v647, 64
        %v899 = vpop.permute.xlu0 %898
        %900 = vrot.lane.b32.xlu0 %v648, 64
        %v901 = vpop.permute.xlu0 %900
        %902 = vrot.lane.b32.xlu0 %v649, 64
        %v903 = vpop.permute.xlu0 %902
        %904 = vrot.lane.b32.xlu0 %v650, 64
        %v905 = vpop.permute.xlu0 %904
        %906 = vrot.lane.b32.xlu0 %v651, 64
        %v907 = vpop.permute.xlu0 %906
        %924 = vrot.lane.b32.xlu0 %v684, 96
        %v925 = vpop.permute.xlu0 %924
        %926 = vrot.lane.b32.xlu0 %v685, 96
        %v927 = vpop.permute.xlu0 %926
        %928 = vrot.lane.b32.xlu0 %v686, 96
        %v929 = vpop.permute.xlu0 %928
        %930 = vrot.lane.b32.xlu0 %v687, 96
        %v931 = vpop.permute.xlu0 %930
        %932 = vrot.lane.b32.xlu0 %v688, 96
        %v933 = vpop.permute.xlu0 %932
        %934 = vrot.lane.b32.xlu0 %v689, 96
        %v935 = vpop.permute.xlu0 %934
        %936 = vrot.lane.b32.xlu0 %v690, 96
        %v937 = vpop.permute.xlu0 %936
        %938 = vrot.lane.b32.xlu0 %v691, 96
        %v939 = vpop.permute.xlu0 %938
        %956 = vrot.lane.b32.xlu0 %v724, 32
        %v957 = vpop.permute.xlu0 %956
        %958 = vrot.lane.b32.xlu0 %v725, 32
        %v959 = vpop.permute.xlu0 %958
        %960 = vrot.lane.b32.xlu0 %v726, 32
        %v961 = vpop.permute.xlu0 %960
        %962 = vrot.lane.b32.xlu0 %v727, 32
        %v963 = vpop.permute.xlu0 %962
        %964 = vrot.lane.b32.xlu0 %v728, 32
        %v965 = vpop.permute.xlu0 %964
        %966 = vrot.lane.b32.xlu0 %v729, 32
        %v967 = vpop.permute.xlu0 %966
        %968 = vrot.lane.b32.xlu0 %v730, 32
        %v969 = vpop.permute.xlu0 %968
        %970 = vrot.lane.b32.xlu0 %v731, 32
        %v971 = vpop.permute.xlu0 %970
        %988 = vrot.lane.b32.xlu0 %v764, 64
        %v989 = vpop.permute.xlu0 %988
        %990 = vrot.lane.b32.xlu0 %v765, 64
        %v991 = vpop.permute.xlu0 %990
        %992 = vrot.lane.b32.xlu0 %v766, 64
        %v993 = vpop.permute.xlu0 %992
        %994 = vrot.lane.b32.xlu0 %v767, 64
        %v995 = vpop.permute.xlu0 %994
        %996 = vrot.lane.b32.xlu0 %v768, 64
        %v997 = vpop.permute.xlu0 %996
        %998 = vrot.lane.b32.xlu0 %v769, 64
        %v999 = vpop.permute.xlu0 %998
        %1000 = vrot.lane.b32.xlu0 %v770, 64
        %v1001 = vpop.permute.xlu0 %1000
        %1002 = vrot.lane.b32.xlu0 %v771, 64
        %v1003 = vpop.permute.xlu0 %1002
        %1020 = vrot.lane.b32.xlu0 %v804, 96
        %v1021 = vpop.permute.xlu0 %1020
        %1022 = vrot.lane.b32.xlu0 %v805, 96
        %v1023 = vpop.permute.xlu0 %1022
        %1024 = vrot.lane.b32.xlu0 %v806, 96
        %v1025 = vpop.permute.xlu0 %1024
        %1026 = vrot.lane.b32.xlu0 %v807, 96
        %v1027 = vpop.permute.xlu0 %1026
        %1028 = vrot.lane.b32.xlu0 %v808, 96
        %v1029 = vpop.permute.xlu0 %1028
        %1030 = vrot.lane.b32.xlu0 %v809, 96
        %v1031 = vpop.permute.xlu0 %1030
        %1032 = vrot.lane.b32.xlu0 %v810, 96
        %v1033 = vpop.permute.xlu0 %1032
        %1034 = vrot.lane.b32.xlu0 %v811, 96
        %v1035 = vpop.permute.xlu0 %1034
        %v1044 = vsel %vm337, %v547, %v861
        %v1045 = vsel %vm337, %v548, %v863
        %v1046 = vsel %vm337, %v549, %v865
        %v1047 = vsel %vm337, %v550, %v867
        %v1048 = vsel %vm337, %v551, %v869
        %v1049 = vsel %vm337, %v552, %v871
        %v1050 = vsel %vm337, %v553, %v873
        %v1051 = vsel %vm337, %v554, %v875
        %vm1052 = vcmask 523264
        %v1053 = vsel %vm1052, %v1044, %v893
        %v1054 = vsel %vm1052, %v1045, %v895
        %v1055 = vsel %vm1052, %v1046, %v897
        %v1056 = vsel %vm1052, %v1047, %v899
        %v1057 = vsel %vm1052, %v1048, %v901
        %v1058 = vsel %vm1052, %v1049, %v903
        %v1059 = vsel %vm1052, %v1050, %v905
        %v1060 = vsel %vm1052, %v1051, %v907
        %vm1061 = vcmask 785408
        %v1062 = vsel %vm1061, %v1053, %v925
        %v1063 = vsel %vm1061, %v1054, %v927
        %v1064 = vsel %vm1061, %v1055, %v929
        %v1065 = vsel %vm1061, %v1056, %v931
        %v1066 = vsel %vm1061, %v1057, %v933
        %v1067 = vsel %vm1061, %v1058, %v935
        %v1068 = vsel %vm1061, %v1059, %v937
        %v1069 = vsel %vm1061, %v1060, %v939
        %v1070 = vsel %vm337, %v480, %v957
        %v1071 = vsel %vm337, %v481, %v959
        %v1072 = vsel %vm337, %v482, %v961
        %v1073 = vsel %vm337, %v483, %v963
        %v1074 = vsel %vm337, %v484, %v965
        %v1075 = vsel %vm337, %v485, %v967
        %v1076 = vsel %vm337, %v486, %v969
        %v1077 = vsel %vm337, %v487, %v971
        %v1078 = vsel %vm1052, %v1070, %v989
        %v1079 = vsel %vm1052, %v1071, %v991
        %v1080 = vsel %vm1052, %v1072, %v993
        %v1081 = vsel %vm1052, %v1073, %v995
        %v1082 = vsel %vm1052, %v1074, %v997
        %v1083 = vsel %vm1052, %v1075, %v999
        %v1084 = vsel %vm1052, %v1076, %v1001
        %v1085 = vsel %vm1052, %v1077, %v1003
        %v1086 = vsel %vm1061, %v1078, %v1021
        %v1087 = vsel %vm1061, %v1079, %v1023
        %v1088 = vsel %vm1061, %v1080, %v1025
        %v1089 = vsel %vm1061, %v1081, %v1027
        %v1090 = vsel %vm1061, %v1082, %v1029
        %v1091 = vsel %vm1061, %v1083, %v1031
        %v1092 = vsel %vm1061, %v1084, %v1033
        %v1093 = vsel %vm1061, %v1085, %v1035
        %v1094 = vpack.c.bf16 %v1063, %v1062
        %v1095 = vpack.c.bf16 %v1087, %v1086
        %v1096 = vpack.c.bf16 %v845, %v844
        %v1097 = vpack.c.bf16 %v1065, %v1064
        %v1098 = vpack.c.bf16 %v1089, %v1088
        %v1099 = vpack.c.bf16 %v847, %v846
        %v1100 = vpack.c.bf16 %v1067, %v1066
        %v1101 = vpack.c.bf16 %v1091, %v1090
        %v1102 = vpack.c.bf16 %v849, %v848
        %v1103 = vpack.c.bf16 %v1069, %v1068
        %v1104 = vpack.c.bf16 %v1093, %v1092
        %v1105 = vpack.c.bf16 %v851, %v850
        %v1106 = vld [vmem:[%s5] sm:$0xf]
        %v1107 = vld [vmem:[%s5 + $0x4] sm:$0xf]
        %v1108 = vld [vmem:[%s5 + $0x8] sm:$0xf]
        %v1109 = vld [vmem:[%s5 + $0xc] sm:$0xf]
        %v1110 = vld [vmem:[%s5 + $0x10] sm:$0xf]
        %v1111 = vld [vmem:[%s5 + $0x14] sm:$0xf]
        %v1112 = vld [vmem:[%s5 + $0x18] sm:$0xf]
        %v1113 = vld [vmem:[%s5 + $0x1c] sm:$0xf]
        %v1114 = vld [vmem:[%s5 + $0x20] sm:$0xf]
        %v1115 = vld [vmem:[%s5 + $0x24] sm:$0xf]
        %v1116 = vld [vmem:[%s5 + $0x28] sm:$0xf]
        %v1117 = vld [vmem:[%s5 + $0x2c] sm:$0xf]
        %v1118 = vld [vmem:[%s5 + $0x30] sm:$0xf]
        %v1119 = vld [vmem:[%s5 + $0x34] sm:$0xf]
        %v1120 = vld [vmem:[%s5 + $0x38] sm:$0xf]
        %v1121 = vld [vmem:[%s5 + $0x3c] sm:$0xf]
        %v1122 = vld [vmem:[%s5 + $0x40] sm:$0xf]
        %v1123 = vld [vmem:[%s5 + $0x44] sm:$0xf]
        %v1124 = vld [vmem:[%s5 + $0x48] sm:$0xf]
        %v1125 = vld [vmem:[%s5 + $0x4c] sm:$0xf]
        %v1126 = vld [vmem:[%s5 + $0x50] sm:$0xf]
        %v1127 = vld [vmem:[%s5 + $0x54] sm:$0xf]
        %v1128 = vld [vmem:[%s5 + $0x58] sm:$0xf]
        %v1129 = vld [vmem:[%s5 + $0x5c] sm:$0xf]
        %v1130 = vld [vmem:[%s5 + $0x60] sm:$0xf]
        %v1131 = vld [vmem:[%s5 + $0x64] sm:$0xf]
        %v1132 = vld [vmem:[%s5 + $0x68] sm:$0xf]
        %v1133 = vld [vmem:[%s5 + $0x6c] sm:$0xf]
        %v1134 = vld [vmem:[%s5 + $0x70] sm:$0xf]
        %v1135 = vld [vmem:[%s5 + $0x74] sm:$0xf]
        %v1136 = vld [vmem:[%s5 + $0x78] sm:$0xf]
        %v1137 = vld [vmem:[%s5 + $0x7c] sm:$0xf]
        %v1138 = vld [vmem:[%s5 + $0x80] sm:$0xf]
        %v1139 = vld [vmem:[%s5 + $0x84] sm:$0xf]
        %v1140 = vld [vmem:[%s5 + $0x88] sm:$0xf]
        %v1141 = vld [vmem:[%s5 + $0x8c] sm:$0xf]
        %v1142 = vld [vmem:[%s317] sm:$0x1]
        %v1144 = vlaneseq
        %v1145 = vshrl.u32 %v1144, 7
        %v1146 = vsub.s32 0, %v1145
        %v1147 = vrot.slane %v1142, %v1146
        %v1185 = vunpack.c.l.b16 %v1106
        %v1186 = vunpack.c.l.b16 %v1107
        %v1187 = vunpack.c.l.b16 %v1108
        %v1188 = vunpack.c.l.b16 %v1109
        %v1189 = vunpack.c.l.b16 %v1110
        %v1190 = vunpack.c.l.b16 %v1111
        %v1191 = vunpack.c.l.b16 %v1112
        %v1192 = vunpack.c.l.b16 %v1113
        %v1193 = vunpack.c.l.b16 %v1114
        %v1194 = vunpack.c.l.b16 %v1115
        %v1195 = vunpack.c.l.b16 %v1116
        %v1196 = vunpack.c.l.b16 %v1117
        %v1197 = vunpack.c.l.b16 %v1118
        %v1198 = vunpack.c.l.b16 %v1119
        %v1199 = vunpack.c.l.b16 %v1120
        %v1200 = vunpack.c.l.b16 %v1121
        %v1201 = vunpack.c.l.b16 %v1122
        %v1202 = vunpack.c.l.b16 %v1123
        %v1203 = vunpack.c.l.b16 %v1124
        %v1204 = vunpack.c.l.b16 %v1125
        %v1205 = vunpack.c.l.b16 %v1126
        %v1206 = vunpack.c.l.b16 %v1127
        %v1207 = vunpack.c.l.b16 %v1128
        %v1208 = vunpack.c.l.b16 %v1129
        %v1209 = vunpack.c.l.b16 %v1130
        %v1210 = vunpack.c.l.b16 %v1131
        %v1211 = vunpack.c.l.b16 %v1132
        %v1212 = vunpack.c.l.b16 %v1133
        %v1213 = vunpack.c.l.b16 %v1134
        %v1214 = vunpack.c.l.b16 %v1135
        %v1215 = vunpack.c.l.b16 %v1136
        %v1216 = vunpack.c.l.b16 %v1137
        %v1217 = vunpack.c.l.b16 %v1138
        %v1218 = vunpack.c.l.b16 %v1139
        %v1219 = vunpack.c.l.b16 %v1140
        %v1220 = vunpack.c.l.b16 %v1141
        %v1221 = vpack.c.b16 %v1186, %v1185
        %v1222 = vpack.c.b16 %v1188, %v1187
        %v1223 = vpack.c.b16 %v1190, %v1189
        %v1224 = vpack.c.b16 %v1192, %v1191
        %v1225 = vpack.c.b16 %v1194, %v1193
        %v1226 = vpack.c.b16 %v1196, %v1195
        %v1227 = vpack.c.b16 %v1198, %v1197
        %v1228 = vpack.c.b16 %v1200, %v1199
        %v1229 = vpack.c.b16 %v1202, %v1201
        %v1230 = vpack.c.b16 %v1204, %v1203
        %v1231 = vpack.c.b16 %v1206, %v1205
        %v1232 = vpack.c.b16 %v1208, %v1207
        %v1233 = vpack.c.b16 %v1210, %v1209
        %v1234 = vpack.c.b16 %v1212, %v1211
        %v1235 = vpack.c.b16 %v1214, %v1213
        %v1236 = vpack.c.b16 %v1216, %v1215
        %v1237 = vpack.c.b16 %v1218, %v1217
        %v1238 = vpack.c.b16 %v1220, %v1219
        %v1258 = vsel %vm337, %v1096, 0
        %v1261 = vsel %vm337, %v1099, 0
        %v1264 = vsel %vm337, %v1102, 0
        %v1267 = vsel %vm337, %v1105, 0
        %1269 = vmatprep.subr.bf16.mxu0 0
        %1270 = vmatpush1.bf16.msra.mxu0 %v1228
        %1271 = vmatprep.subr.bf16.mxu0 0
        %1272 = vmatpush1.bf16.msra.mxu0 %v1227
        %1273 = vmatprep.subr.bf16.mxu0 0
        %1274 = vmatpush1.bf16.msra.mxu0 %v1226
        %1275 = vmatprep.subr.bf16.mxu0 0
        %1276 = vmatpush1.bf16.msra.mxu0 %v1225
        %1277 = vmatprep.subr.bf16.mxu0 0
        %1278 = vmatpush1.bf16.msra.mxu0 %v1224
        %1279 = vmatprep.subr.bf16.mxu0 0
        %1280 = vmatpush1.bf16.msra.mxu0 %v1223
        %1281 = vmatprep.subr.bf16.mxu0 0
        %1282 = vmatpush1.bf16.msra.mxu0 %v1222
        %1283 = vmatprep.subr.bf16.mxu0 0
        %1284 = vmatpush1.bf16.msra.mxu0 %v1221
        %1285 = vmatprep.subr.bf16.mxu0 0
        %1286 = vmatpush2.bf16.msra.mxu0 %v1236
        %1287 = vmatprep.subr.bf16.mxu0 0
        %1288 = vmatpush2.bf16.msra.mxu0 %v1235
        %1289 = vmatprep.subr.bf16.mxu0 0
        %1290 = vmatpush2.bf16.msra.mxu0 %v1234
        %1291 = vmatprep.subr.bf16.mxu0 0
        %1292 = vmatpush2.bf16.msra.mxu0 %v1233
        %1293 = vmatprep.subr.bf16.mxu0 0
        %1294 = vmatpush2.bf16.msra.mxu0 %v1232
        %1295 = vmatprep.subr.bf16.mxu0 0
        %1296 = vmatpush2.bf16.msra.mxu0 %v1231
        %1297 = vmatprep.subr.bf16.mxu0 0
        %1298 = vmatpush2.bf16.msra.mxu0 %v1230
        %1299 = vmatprep.subr.bf16.mxu0 0
        %1300 = vmatpush2.bf16.msra.mxu0 %v1229
        %1301 = vmatprep.mubr.bf16.mxu0 %v1095
        %1302 = vmatmul.mubr.bf16.gmra.mxu0 %v1094
        %v1303 = vpop.f32.mrf.mxu0
        %v1304 = vadd.f32 %v1147, %v1303
        %v1305 = vpop.f32.mrf.mxu0
        %v1306 = vpop.f32.mrf.mxu0
        %v1307 = vadd.f32 %v1147, %v1306
        %v1308 = vpop.f32.mrf.mxu0
        %1309 = vmatprep.mubr.bf16.mxu0 %v1098
        %1310 = vmatmul.mubr.bf16.gmra.mxu0 %v1097
        %v1311 = vpop.f32.mrf.mxu0
        %v1312 = vadd.f32 %v1147, %v1311
        %v1313 = vpop.f32.mrf.mxu0
        %v1314 = vpop.f32.mrf.mxu0
        %v1315 = vadd.f32 %v1147, %v1314
        %v1316 = vpop.f32.mrf.mxu0
        %1317 = vmatprep.mubr.bf16.mxu0 %v1101
        %1318 = vmatmul.mubr.bf16.gmra.mxu0 %v1100
        %v1319 = vpop.f32.mrf.mxu0
        %v1320 = vadd.f32 %v1147, %v1319
        %v1321 = vpop.f32.mrf.mxu0
        %v1322 = vpop.f32.mrf.mxu0
        %v1323 = vadd.f32 %v1147, %v1322
        %v1324 = vpop.f32.mrf.mxu0
        %1325 = vmatprep.mubr.bf16.mxu0 %v1104
        %1326 = vmatmul.mubr.bf16.gmra.mxu0 %v1103
        %v1327 = vpop.f32.mrf.mxu0
        %v1328 = vadd.f32 %v1147, %v1327
        %v1329 = vpop.f32.mrf.mxu0
        %v1330 = vpop.f32.mrf.mxu0
        %v1331 = vadd.f32 %v1147, %v1330
        %v1332 = vpop.f32.mrf.mxu0
        %1333 = vdwg.mxu0
        %1334 = vmatprep.subr.bf16.mxu0 0
        %1335 = vmatpush1.bf16.msra.mxu0 0
        %1336 = vmatprep.subr.bf16.mxu0 0
        %1337 = vmatpush1.bf16.msra.mxu0 0
        %1338 = vmatprep.subr.bf16.mxu0 0
        %1339 = vmatpush1.bf16.msra.mxu0 0
        %1340 = vmatprep.subr.bf16.mxu0 0
        %1341 = vmatpush1.bf16.msra.mxu0 0
        %1342 = vmatprep.subr.bf16.mxu0 0
        %1343 = vmatpush1.bf16.msra.mxu0 0
        %1344 = vmatprep.subr.bf16.mxu0 0
        %1345 = vmatpush1.bf16.msra.mxu0 0
        %1346 = vmatprep.subr.bf16.mxu0 0
        %1347 = vmatpush1.bf16.msra.mxu0 %v1238
        %1348 = vmatprep.subr.bf16.mxu0 0
        %1349 = vmatpush1.bf16.msra.mxu0 %v1237
        %1350 = vmatprep.subr.bf16.mxu0 0
        %1351 = vmatpush2.bf16.msra.mxu0 0
        %1352 = vmatprep.subr.bf16.mxu0 0
        %1353 = vmatpush2.bf16.msra.mxu0 0
        %1354 = vmatprep.subr.bf16.mxu0 0
        %1355 = vmatpush2.bf16.msra.mxu0 0
        %1356 = vmatprep.subr.bf16.mxu0 0
        %1357 = vmatpush2.bf16.msra.mxu0 0
        %1358 = vmatprep.subr.bf16.mxu0 0
        %1359 = vmatpush2.bf16.msra.mxu0 0
        %1360 = vmatprep.subr.bf16.mxu0 0
        %1361 = vmatpush2.bf16.msra.mxu0 0
        %1362 = vmatprep.subr.bf16.mxu0 0
        %1363 = vmatpush2.bf16.msra.mxu0 0
        %1364 = vmatprep.subr.bf16.mxu0 0
        %1365 = vmatpush2.bf16.msra.mxu0 0
        %1366 = vmatprep.mubr.bf16.mxu0 0
        %1367 = vmatmul.mubr.bf16.gmra.mxu0 %v1258
        %v1368 = vpop.f32.mrf.mxu0
        %v1369 = vadd.f32 %v1304, %v1368
        %v1370 = vpop.f32.mrf.mxu0
        %v1371 = vpop.f32.mrf.mxu0
        %v1372 = vadd.f32 %v1307, %v1371
        %v1373 = vpop.f32.mrf.mxu0
        %1374 = vmatprep.mubr.bf16.mxu0 0
        %1375 = vmatmul.mubr.bf16.gmra.mxu0 %v1261
        %v1376 = vpop.f32.mrf.mxu0
        %v1377 = vadd.f32 %v1312, %v1376
        %v1378 = vpop.f32.mrf.mxu0
        %v1379 = vpop.f32.mrf.mxu0
        %v1380 = vadd.f32 %v1315, %v1379
        %v1381 = vpop.f32.mrf.mxu0
        %1382 = vmatprep.mubr.bf16.mxu0 0
        %1383 = vmatmul.mubr.bf16.gmra.mxu0 %v1264
        %v1384 = vpop.f32.mrf.mxu0
        %v1385 = vadd.f32 %v1320, %v1384
        %v1386 = vpop.f32.mrf.mxu0
        %v1387 = vpop.f32.mrf.mxu0
        %v1388 = vadd.f32 %v1323, %v1387
        %v1389 = vpop.f32.mrf.mxu0
        %1390 = vmatprep.mubr.bf16.mxu0 0
        %1391 = vmatmul.mubr.bf16.gmra.mxu0 %v1267
        %v1392 = vpop.f32.mrf.mxu0
        %v1393 = vadd.f32 %v1328, %v1392
        %v1394 = vpop.f32.mrf.mxu0
        %v1395 = vpop.f32.mrf.mxu0
        %v1396 = vadd.f32 %v1331, %v1395
        %v1397 = vpop.f32.mrf.mxu0
        %1398 = vdwg.mxu0
        %v1399 = vsel %vm1052, %v1369, 0.0
        %v1400 = vsel %vm1052, %v1372, 0.0
        %v1401 = vadd.f32 %v1399, %v1400
        %v1402 = vsel %vm1052, %v1377, 0.0
        %v1403 = vadd.f32 %v1401, %v1402
        %v1404 = vsel %vm1052, %v1380, 0.0
        %v1405 = vadd.f32 %v1403, %v1404
        %v1406 = vsel %vm1052, %v1385, 0.0
        %v1407 = vadd.f32 %v1405, %v1406
        %v1408 = vsel %vm1052, %v1388, 0.0
        %v1409 = vadd.f32 %v1407, %v1408
        %v1410 = vsel %vm1052, %v1393, 0.0
        %v1411 = vadd.f32 %v1409, %v1410
        %v1412 = vsel %vm1052, %v1396, 0.0
        %v1413 = vadd.f32 %v1411, %v1412
        %v1414 = vrot.slane %v1413, 4
        %v1415 = vadd.f32 %v1413, %v1414
        %v1416 = vrot.slane %v1415, 2
        %v1417 = vadd.f32 %v1415, %v1416
        %v1418 = vrot.slane %v1417, 1
        %v1419 = vadd.f32 %v1417, %v1418
        %v1420 = vmul.f32 %v1419, 0.015625
        %v1421 = vlaneseq
        %v1422 = vand.u32 %v1421, 127
        %vm1423 = vcmp.lt.s32.totalorder %v1422, 0
        %v1424 = vsub.s32 0, %v1422
        %v1425 = vsel %vm1423, %v1424, %v1422
        %v1426 = vshrl.u32 %v1425, 1
        %v1427 = vand.u32 %v1425, 1
        %v1428 = vsub.s32 0, %v1427
        %v1429 = vsel %vm1423, %v1428, %v1427
        %vm1430 = vcmp.ne.s32.totalorder %v1429, 0
        %vm1431 = vcmp.lt.s32.totalorder %v1429, 0
        %vm1432 = vmand %vm1431, %vm1430
        %v1433 = vadd.s32 %v1429, 2
        %v1434 = vsel %vm1432, %v1433, %v1429
        %vm1435 = vcmask 1048064
        %1436 = vrot.lane.b32.xlu0 %v1420, 64
        %v1437 = vpop.permute.xlu0 %1436
        %v1438 = vsel %vm1435, %v1437, %v1420
        %1439 = vrot.lane.b32.xlu0 %v1438, 64
        %v1440 = vpop.permute.xlu0 %1439
        %v1441 = vsel %vm1435, %v1440, %v1420
        %v1442 = vadd.s32 %v1434, 1
        %vm1443 = vcmp.lt.s32.totalorder %v1442, 2
        %1445 = vrot.lane.b32.xlu0 %v1441, 127
        %v1446 = vpop.permute.xlu0 %1445
        %1448 = vrot.lane.b32.xlu0 %v1441, 65
        %v1449 = vpop.permute.xlu0 %1448
        %v1451 = vsel %vm1443, %v1446, %v1449
        %v1452 = vadd.f32 %v1420, %v1451
        %v1453 = vmul.f32 %v1452, 0.5
        %v1454 = vlaneseq
        %v1455 = vshrl.u32 %v1454, 7
        %v1456 = vsub.s32 0, %v1455
        %v1457 = vrot.slane %v1453, %v1456
        %v1458 = vsub.f32 %v1369, %v1457
        %v1459 = vsub.f32 %v1372, %v1457
        %v1460 = vsub.f32 %v1377, %v1457
        %v1461 = vsub.f32 %v1380, %v1457
        %v1462 = vsub.f32 %v1385, %v1457
        %v1463 = vsub.f32 %v1388, %v1457
        %v1464 = vsub.f32 %v1393, %v1457
        %v1465 = vsub.f32 %v1396, %v1457
        %v1466 = vmul.f32 %v1458, %v1458
        %v1467 = vmul.f32 %v1459, %v1459
        %v1468 = vmul.f32 %v1460, %v1460
        %v1469 = vmul.f32 %v1461, %v1461
        %v1470 = vmul.f32 %v1462, %v1462
        %v1471 = vmul.f32 %v1463, %v1463
        %v1472 = vmul.f32 %v1464, %v1464
        %v1473 = vmul.f32 %v1465, %v1465
        %v1474 = vsel %vm1052, %v1466, 0.0
        %v1475 = vsel %vm1052, %v1467, 0.0
        %v1476 = vadd.f32 %v1474, %v1475
        %v1477 = vsel %vm1052, %v1468, 0.0
        %v1478 = vadd.f32 %v1476, %v1477
        %v1479 = vsel %vm1052, %v1469, 0.0
        %v1480 = vadd.f32 %v1478, %v1479
        %v1481 = vsel %vm1052, %v1470, 0.0
        %v1482 = vadd.f32 %v1480, %v1481
        %v1483 = vsel %vm1052, %v1471, 0.0
        %v1484 = vadd.f32 %v1482, %v1483
        %v1485 = vsel %vm1052, %v1472, 0.0
        %v1486 = vadd.f32 %v1484, %v1485
        %v1487 = vsel %vm1052, %v1473, 0.0
        %v1488 = vadd.f32 %v1486, %v1487
        %v1489 = vrot.slane %v1488, 4
        %v1490 = vadd.f32 %v1488, %v1489
        %v1491 = vrot.slane %v1490, 2
        %v1492 = vadd.f32 %v1490, %v1491
        %v1493 = vrot.slane %v1492, 1
        %v1494 = vadd.f32 %v1492, %v1493
        %v1495 = vmul.f32 %v1494, 0.015625
        %1496 = vrot.lane.b32.xlu0 %v1495, 64
        %v1497 = vpop.permute.xlu0 %1496
        %v1498 = vsel %vm1435, %v1497, %v1495
        %1499 = vrot.lane.b32.xlu0 %v1498, 64
        %v1500 = vpop.permute.xlu0 %1499
        %v1501 = vsel %vm1435, %v1500, %v1495
        %1503 = vrot.lane.b32.xlu0 %v1501, 127
        %v1504 = vpop.permute.xlu0 %1503
        %1506 = vrot.lane.b32.xlu0 %v1501, 65
        %v1507 = vpop.permute.xlu0 %1506
        %v1509 = vsel %vm1443, %v1504, %v1507
        %v1510 = vadd.f32 %v1495, %v1509
        %v1511 = vmul.f32 %v1510, 0.5
        %v1512 = vadd.f32 %v1511, 1e-05
        %v1513 = vrsqrt.pop %v1512
        %v1514 = vlaneseq
        %v1515 = vshrl.u32 %v1514, 7
        %v1516 = vsub.s32 0, %v1515
        %v1517 = vrot.slane %v1513, %v1516
        %v1518 = vmul.f32 %v1458, %v1517
        %v1519 = vmul.f32 %v1459, %v1517
        %v1520 = vmul.f32 %v1460, %v1517
        %v1521 = vmul.f32 %v1461, %v1517
        %v1522 = vmul.f32 %v1462, %v1517
        %v1523 = vmul.f32 %v1463, %v1517
        %v1524 = vmul.f32 %v1464, %v1517
        %v1525 = vmul.f32 %v1465, %v1517
        %v1526 = vlaneseq
        %v1527 = vshrl.u32 %v1526, 7
        %v1528 = vsub.s32 0, %v1527
        %v1529 = vrot.slane %v336, %v1528
        %v1530 = vmul.f32 %v1518, %v1529
        %v1531 = vmul.f32 %v1519, %v1529
        %v1532 = vmul.f32 %v1520, %v1529
        %v1533 = vmul.f32 %v1521, %v1529
        %v1534 = vmul.f32 %v1522, %v1529
        %v1535 = vmul.f32 %v1523, %v1529
        %v1536 = vmul.f32 %v1524, %v1529
        %v1537 = vmul.f32 %v1525, %v1529
        %v1538 = vlaneseq
        %v1539 = vshrl.u32 %v1538, 7
        %v1540 = vsub.s32 1, %v1539
        %v1541 = vrot.slane %v336, %v1540
        %v1542 = vadd.f32 %v1530, %v1541
        %v1543 = vadd.f32 %v1531, %v1541
        %v1544 = vadd.f32 %v1532, %v1541
        %v1545 = vadd.f32 %v1533, %v1541
        %v1546 = vadd.f32 %v1534, %v1541
        %v1547 = vadd.f32 %v1535, %v1541
        %v1548 = vadd.f32 %v1536, %v1541
        %v1549 = vadd.f32 %v1537, %v1541
        %v1550 = vxor.u32 %v1542, 2147483648
        %v1551 = vxor.u32 %v1543, 2147483648
        %v1552 = vxor.u32 %v1544, 2147483648
        %v1553 = vxor.u32 %v1545, 2147483648
        %v1554 = vxor.u32 %v1546, 2147483648
        %v1555 = vxor.u32 %v1547, 2147483648
        %v1556 = vxor.u32 %v1548, 2147483648
        %v1557 = vxor.u32 %v1549, 2147483648
        %v1558 = vmul.f32 %v1550, 1.442695
        %v1559 = vpow.pop %v1558
        %v1560 = vmul.f32 %v1551, 1.442695
        %v1561 = vpow.pop %v1560
        %v1562 = vmul.f32 %v1552, 1.442695
        %v1563 = vpow.pop %v1562
        %v1564 = vmul.f32 %v1553, 1.442695
        %v1565 = vpow.pop %v1564
        %v1566 = vmul.f32 %v1554, 1.442695
        %v1567 = vpow.pop %v1566
        %v1568 = vmul.f32 %v1555, 1.442695
        %v1569 = vpow.pop %v1568
        %v1570 = vmul.f32 %v1556, 1.442695
        %v1571 = vpow.pop %v1570
        %v1572 = vmul.f32 %v1557, 1.442695
        %v1573 = vpow.pop %v1572
        %v1574 = vadd.f32 %v1559, 1.0
        %v1575 = vadd.f32 %v1561, 1.0
        %v1576 = vadd.f32 %v1563, 1.0
        %v1577 = vadd.f32 %v1565, 1.0
        %v1578 = vadd.f32 %v1567, 1.0
        %v1579 = vadd.f32 %v1569, 1.0
        %v1580 = vadd.f32 %v1571, 1.0
        %v1581 = vadd.f32 %v1573, 1.0
        %v1582 = vrcp.pop %v1574
        %v1583 = vmul.f32 1.0, %v1582
        %v1584 = vrcp.pop %v1575
        %v1585 = vmul.f32 1.0, %v1584
        %v1586 = vrcp.pop %v1576
        %v1587 = vmul.f32 1.0, %v1586
        %v1588 = vrcp.pop %v1577
        %v1589 = vmul.f32 1.0, %v1588
        %v1590 = vrcp.pop %v1578
        %v1591 = vmul.f32 1.0, %v1590
        %v1592 = vrcp.pop %v1579
        %v1593 = vmul.f32 1.0, %v1592
        %v1594 = vrcp.pop %v1580
        %v1595 = vmul.f32 1.0, %v1594
        %v1596 = vrcp.pop %v1581
        %v1597 = vmul.f32 1.0, %v1596
        %v1598 = vmul.f32 %v1542, %v1583
        %v1599 = vmul.f32 %v1543, %v1585
        %v1600 = vmul.f32 %v1544, %v1587
        %v1601 = vmul.f32 %v1545, %v1589
        %v1602 = vmul.f32 %v1546, %v1591
        %v1603 = vmul.f32 %v1547, %v1593
        %v1604 = vmul.f32 %v1548, %v1595
        %v1605 = vmul.f32 %v1549, %v1597
        %v1606 = vrot.slane %v1598, 7
        %v1607 = vrot.slane %v1599, 7
        %v1608 = vrot.slane %v1600, 7
        %v1609 = vrot.slane %v1601, 7
        %v1610 = vrot.slane %v1602, 7
        %v1611 = vrot.slane %v1603, 7
        %v1612 = vrot.slane %v1604, 7
        %v1613 = vrot.slane %v1605, 7
        %v1614 = vsel %vm498, %v1612, %v1613
        %v1615 = vsel %vm498, %v1611, %v1612
        %v1616 = vsel %vm498, %v1610, %v1611
        %v1617 = vsel %vm498, %v1609, %v1610
        %v1618 = vsel %vm498, %v1608, %v1609
        %v1619 = vsel %vm498, %v1607, %v1608
        %v1620 = vsel %vm498, %v1606, %v1607
        %v1621 = vsel %vm498, %v1613, %v1606
        %v1622 = vmul.f32 %v1614, %v510
        %v1623 = vmul.f32 %v1621, %v515
        %v1624 = vmul.f32 %v1620, %v520
        %v1625 = vmul.f32 %v1619, %v525
        %v1626 = vmul.f32 %v1618, %v530
        %v1627 = vmul.f32 %v1617, %v535
        %v1628 = vmul.f32 %v1616, %v540
        %v1629 = vmul.f32 %v1615, %v545
        %v1630 = vmul.f32 %v1605, %v557
        %v1631 = vmul.f32 %v1598, %v561
        %v1632 = vmul.f32 %v1599, %v565
        %v1633 = vmul.f32 %v1600, %v569
        %v1634 = vmul.f32 %v1601, %v573
        %v1635 = vmul.f32 %v1602, %v577
        %v1636 = vmul.f32 %v1603, %v581
        %v1637 = vmul.f32 %v1604, %v585
        %v1638 = vrot.slane %v1598, 1
        %v1639 = vrot.slane %v1599, 1
        %v1640 = vrot.slane %v1600, 1
        %v1641 = vrot.slane %v1601, 1
        %v1642 = vrot.slane %v1602, 1
        %v1643 = vrot.slane %v1603, 1
        %v1644 = vrot.slane %v1604, 1
        %v1645 = vrot.slane %v1605, 1
        %v1646 = vsel %vm603, %v1644, %v1645
        %v1647 = vsel %vm603, %v1643, %v1644
        %v1648 = vsel %vm603, %v1642, %v1643
        %v1649 = vsel %vm603, %v1641, %v1642
        %v1650 = vsel %vm603, %v1640, %v1641
        %v1651 = vsel %vm603, %v1639, %v1640
        %v1652 = vsel %vm603, %v1638, %v1639
        %v1653 = vsel %vm603, %v1645, %v1638
        %v1654 = vmul.f32 %v1653, %v614
        %v1655 = vmul.f32 %v1652, %v618
        %v1656 = vmul.f32 %v1651, %v622
        %v1657 = vmul.f32 %v1650, %v626
        %v1658 = vmul.f32 %v1649, %v630
        %v1659 = vmul.f32 %v1648, %v634
        %v1660 = vmul.f32 %v1647, %v638
        %v1661 = vmul.f32 %v1646, %v642
        %v1662 = vmul.f32 %v1621, %v654
        %v1663 = vmul.f32 %v1620, %v658
        %v1664 = vmul.f32 %v1619, %v662
        %v1665 = vmul.f32 %v1618, %v666
        %v1666 = vmul.f32 %v1617, %v670
        %v1667 = vmul.f32 %v1616, %v674
        %v1668 = vmul.f32 %v1615, %v678
        %v1669 = vmul.f32 %v1614, %v682
        %v1670 = vmul.f32 %v1652, %v694
        %v1671 = vmul.f32 %v1651, %v698
        %v1672 = vmul.f32 %v1650, %v702
        %v1673 = vmul.f32 %v1649, %v706
        %v1674 = vmul.f32 %v1648, %v710
        %v1675 = vmul.f32 %v1647, %v714
        %v1676 = vmul.f32 %v1646, %v718
        %v1677 = vmul.f32 %v1653, %v722
        %v1678 = vmul.f32 %v1620, %v734
        %v1679 = vmul.f32 %v1619, %v738
        %v1680 = vmul.f32 %v1618, %v742
        %v1681 = vmul.f32 %v1617, %v746
        %v1682 = vmul.f32 %v1616, %v750
        %v1683 = vmul.f32 %v1615, %v754
        %v1684 = vmul.f32 %v1614, %v758
        %v1685 = vmul.f32 %v1621, %v762
        %v1686 = vmul.f32 %v1599, %v774
        %v1687 = vmul.f32 %v1600, %v778
        %v1688 = vmul.f32 %v1601, %v782
        %v1689 = vmul.f32 %v1602, %v786
        %v1690 = vmul.f32 %v1603, %v790
        %v1691 = vmul.f32 %v1604, %v794
        %v1692 = vmul.f32 %v1605, %v798
        %v1693 = vmul.f32 %v1598, %v802
        %v1694 = vmul.f32 %v1651, %v814
        %v1695 = vmul.f32 %v1650, %v818
        %v1696 = vmul.f32 %v1649, %v822
        %v1697 = vmul.f32 %v1648, %v826
        %v1698 = vmul.f32 %v1647, %v830
        %v1699 = vmul.f32 %v1646, %v834
        %v1700 = vmul.f32 %v1653, %v838
        %v1701 = vmul.f32 %v1652, %v842
        %1710 = vrot.lane.b32.xlu0 %v1630, 64
        %v1711 = vpop.permute.xlu0 %1710
        %1712 = vrot.lane.b32.xlu0 %v1631, 64
        %v1713 = vpop.permute.xlu0 %1712
        %1714 = vrot.lane.b32.xlu0 %v1632, 64
        %v1715 = vpop.permute.xlu0 %1714
        %1716 = vrot.lane.b32.xlu0 %v1633, 64
        %v1717 = vpop.permute.xlu0 %1716
        %1718 = vrot.lane.b32.xlu0 %v1634, 64
        %v1719 = vpop.permute.xlu0 %1718
        %1720 = vrot.lane.b32.xlu0 %v1635, 64
        %v1721 = vpop.permute.xlu0 %1720
        %1722 = vrot.lane.b32.xlu0 %v1636, 64
        %v1723 = vpop.permute.xlu0 %1722
        %1724 = vrot.lane.b32.xlu0 %v1637, 64
        %v1725 = vpop.permute.xlu0 %1724
        %1742 = vrot.lane.b32.xlu0 %v1662, 64
        %v1743 = vpop.permute.xlu0 %1742
        %1744 = vrot.lane.b32.xlu0 %v1663, 64
        %v1745 = vpop.permute.xlu0 %1744
        %1746 = vrot.lane.b32.xlu0 %v1664, 64
        %v1747 = vpop.permute.xlu0 %1746
        %1748 = vrot.lane.b32.xlu0 %v1665, 64
        %v1749 = vpop.permute.xlu0 %1748
        %1750 = vrot.lane.b32.xlu0 %v1666, 64
        %v1751 = vpop.permute.xlu0 %1750
        %1752 = vrot.lane.b32.xlu0 %v1667, 64
        %v1753 = vpop.permute.xlu0 %1752
        %1754 = vrot.lane.b32.xlu0 %v1668, 64
        %v1755 = vpop.permute.xlu0 %1754
        %1756 = vrot.lane.b32.xlu0 %v1669, 64
        %v1757 = vpop.permute.xlu0 %1756
        %1774 = vrot.lane.b32.xlu0 %v1670, 64
        %v1775 = vpop.permute.xlu0 %1774
        %1776 = vrot.lane.b32.xlu0 %v1671, 64
        %v1777 = vpop.permute.xlu0 %1776
        %1778 = vrot.lane.b32.xlu0 %v1672, 64
        %v1779 = vpop.permute.xlu0 %1778
        %1780 = vrot.lane.b32.xlu0 %v1673, 64
        %v1781 = vpop.permute.xlu0 %1780
        %1782 = vrot.lane.b32.xlu0 %v1674, 64
        %v1783 = vpop.permute.xlu0 %1782
        %1784 = vrot.lane.b32.xlu0 %v1675, 64
        %v1785 = vpop.permute.xlu0 %1784
        %1786 = vrot.lane.b32.xlu0 %v1676, 64
        %v1787 = vpop.permute.xlu0 %1786
        %1788 = vrot.lane.b32.xlu0 %v1677, 64
        %v1789 = vpop.permute.xlu0 %1788
        %1806 = vrot.lane.b32.xlu0 %v1686, 64
        %v1807 = vpop.permute.xlu0 %1806
        %1808 = vrot.lane.b32.xlu0 %v1687, 64
        %v1809 = vpop.permute.xlu0 %1808
        %1810 = vrot.lane.b32.xlu0 %v1688, 64
        %v1811 = vpop.permute.xlu0 %1810
        %1812 = vrot.lane.b32.xlu0 %v1689, 64
        %v1813 = vpop.permute.xlu0 %1812
        %1814 = vrot.lane.b32.xlu0 %v1690, 64
        %v1815 = vpop.permute.xlu0 %1814
        %1816 = vrot.lane.b32.xlu0 %v1691, 64
        %v1817 = vpop.permute.xlu0 %1816
        %1818 = vrot.lane.b32.xlu0 %v1692, 64
        %v1819 = vpop.permute.xlu0 %1818
        %1820 = vrot.lane.b32.xlu0 %v1693, 64
        %v1821 = vpop.permute.xlu0 %1820
        %v1830 = vsel %vm1052, %v1622, %v1711
        %v1831 = vsel %vm1052, %v1623, %v1713
        %v1832 = vsel %vm1052, %v1624, %v1715
        %v1833 = vsel %vm1052, %v1625, %v1717
        %v1834 = vsel %vm1052, %v1626, %v1719
        %v1835 = vsel %vm1052, %v1627, %v1721
        %v1836 = vsel %vm1052, %v1628, %v1723
        %v1837 = vsel %vm1052, %v1629, %v1725
        %v1838 = vsel %vm1052, %v1654, %v1743
        %v1839 = vsel %vm1052, %v1655, %v1745
        %v1840 = vsel %vm1052, %v1656, %v1747
        %v1841 = vsel %vm1052, %v1657, %v1749
        %v1842 = vsel %vm1052, %v1658, %v1751
        %v1843 = vsel %vm1052, %v1659, %v1753
        %v1844 = vsel %vm1052, %v1660, %v1755
        %v1845 = vsel %vm1052, %v1661, %v1757
        %v1846 = vsel %vm1052, %v1598, %v1775
        %v1847 = vsel %vm1052, %v1599, %v1777
        %v1848 = vsel %vm1052, %v1600, %v1779
        %v1849 = vsel %vm1052, %v1601, %v1781
        %v1850 = vsel %vm1052, %v1602, %v1783
        %v1851 = vsel %vm1052, %v1603, %v1785
        %v1852 = vsel %vm1052, %v1604, %v1787
        %v1853 = vsel %vm1052, %v1605, %v1789
        %v1854 = vsel %vm1052, %v1678, %v1807
        %v1855 = vsel %vm1052, %v1679, %v1809
        %v1856 = vsel %vm1052, %v1680, %v1811
        %v1857 = vsel %vm1052, %v1681, %v1813
        %v1858 = vsel %vm1052, %v1682, %v1815
        %v1859 = vsel %vm1052, %v1683, %v1817
        %v1860 = vsel %vm1052, %v1684, %v1819
        %v1861 = vsel %vm1052, %v1685, %v1821
        %v1862 = vpack.c.bf16 %v1831, %v1830
        %v1863 = vpack.c.bf16 %v1839, %v1838
        %v1864 = vpack.c.bf16 %v1847, %v1846
        %v1865 = vpack.c.bf16 %v1855, %v1854
        %v1866 = vpack.c.bf16 %v1695, %v1694
        %v1867 = vpack.c.bf16 %v1833, %v1832
        %v1868 = vpack.c.bf16 %v1841, %v1840
        %v1869 = vpack.c.bf16 %v1849, %v1848
        %v1870 = vpack.c.bf16 %v1857, %v1856
        %v1871 = vpack.c.bf16 %v1697, %v1696
        %v1872 = vpack.c.bf16 %v1835, %v1834
        %v1873 = vpack.c.bf16 %v1843, %v1842
        %v1874 = vpack.c.bf16 %v1851, %v1850
        %v1875 = vpack.c.bf16 %v1859, %v1858
        %v1876 = vpack.c.bf16 %v1699, %v1698
        %v1877 = vpack.c.bf16 %v1837, %v1836
        %v1878 = vpack.c.bf16 %v1845, %v1844
        %v1879 = vpack.c.bf16 %v1853, %v1852
        %v1880 = vpack.c.bf16 %v1861, %v1860
        %v1881 = vpack.c.bf16 %v1701, %v1700
        %v1882 = vld [vmem:[%s6] sm:$0xf]
        %v1883 = vld [vmem:[%s6 + $0x4] sm:$0xf]
        %v1884 = vld [vmem:[%s6 + $0x8] sm:$0xf]
        %v1885 = vld [vmem:[%s6 + $0xc] sm:$0xf]
        %v1886 = vld [vmem:[%s6 + $0x10] sm:$0xf]
        %v1887 = vld [vmem:[%s6 + $0x14] sm:$0xf]
        %v1888 = vld [vmem:[%s6 + $0x18] sm:$0xf]
        %v1889 = vld [vmem:[%s6 + $0x1c] sm:$0xf]
        %v1890 = vld [vmem:[%s6 + $0x20] sm:$0xf]
        %v1891 = vld [vmem:[%s6 + $0x24] sm:$0xf]
        %v1892 = vld [vmem:[%s6 + $0x28] sm:$0xf]
        %v1893 = vld [vmem:[%s6 + $0x2c] sm:$0xf]
        %v1894 = vld [vmem:[%s6 + $0x30] sm:$0xf]
        %v1895 = vld [vmem:[%s6 + $0x34] sm:$0xf]
        %v1896 = vld [vmem:[%s6 + $0x38] sm:$0xf]
        %v1897 = vld [vmem:[%s6 + $0x3c] sm:$0xf]
        %v1898 = vld [vmem:[%s6 + $0x40] sm:$0xf]
        %v1899 = vld [vmem:[%s6 + $0x44] sm:$0xf]
        %v1900 = vld [vmem:[%s6 + $0x48] sm:$0xf]
        %v1901 = vld [vmem:[%s6 + $0x4c] sm:$0xf]
        %v1902 = vld [vmem:[%s6 + $0x50] sm:$0xf]
        %v1903 = vld [vmem:[%s6 + $0x54] sm:$0xf]
        %v1904 = vld [vmem:[%s6 + $0x58] sm:$0xf]
        %v1905 = vld [vmem:[%s6 + $0x5c] sm:$0xf]
        %v1906 = vld [vmem:[%s6 + $0x60] sm:$0xf]
        %v1907 = vld [vmem:[%s6 + $0x64] sm:$0xf]
        %v1908 = vld [vmem:[%s6 + $0x68] sm:$0xf]
        %v1909 = vld [vmem:[%s6 + $0x6c] sm:$0xf]
        %v1910 = vld [vmem:[%s6 + $0x70] sm:$0xf]
        %v1911 = vld [vmem:[%s6 + $0x74] sm:$0xf]
        %v1912 = vld [vmem:[%s6 + $0x78] sm:$0xf]
        %v1913 = vld [vmem:[%s6 + $0x7c] sm:$0xf]
        %v1914 = vld [vmem:[%s6 + $0x80] sm:$0xf]
        %v1915 = vld [vmem:[%s6 + $0x84] sm:$0xf]
        %v1916 = vld [vmem:[%s6 + $0x88] sm:$0xf]
        %v1917 = vld [vmem:[%s6 + $0x8c] sm:$0xf]
        %v1918 = vld [vmem:[%s6 + $0x90] sm:$0xf]
        %v1919 = vld [vmem:[%s6 + $0x94] sm:$0xf]
        %v1920 = vld [vmem:[%s6 + $0x98] sm:$0xf]
        %v1921 = vld [vmem:[%s6 + $0x9c] sm:$0xf]
        %v1922 = vld [vmem:[%s6 + $0xa0] sm:$0xf]
        %v1923 = vld [vmem:[%s6 + $0xa4] sm:$0xf]
        %v1924 = vld [vmem:[%s6 + $0xa8] sm:$0xf]
        %v1925 = vld [vmem:[%s6 + $0xac] sm:$0xf]
        %v1926 = vld [vmem:[%s6 + $0xb0] sm:$0xf]
        %v1927 = vld [vmem:[%s6 + $0xb4] sm:$0xf]
        %v1928 = vld [vmem:[%s6 + $0xb8] sm:$0xf]
        %v1929 = vld [vmem:[%s6 + $0xbc] sm:$0xf]
        %v1930 = vld [vmem:[%s6 + $0xc0] sm:$0xf]
        %v1931 = vld [vmem:[%s6 + $0xc4] sm:$0xf]
        %v1932 = vld [vmem:[%s6 + $0xc8] sm:$0xf]
        %v1933 = vld [vmem:[%s6 + $0xcc] sm:$0xf]
        %v1934 = vld [vmem:[%s6 + $0xd0] sm:$0xf]
        %v1935 = vld [vmem:[%s6 + $0xd4] sm:$0xf]
        %v1936 = vld [vmem:[%s6 + $0xd8] sm:$0xf]
        %v1937 = vld [vmem:[%s6 + $0xdc] sm:$0xf]
        %v1938 = vld [vmem:[%s6 + $0xe0] sm:$0xf]
        %v1939 = vld [vmem:[%s6 + $0xe4] sm:$0xf]
        %v1940 = vld [vmem:[%s6 + $0xe8] sm:$0xf]
        %v1941 = vld [vmem:[%s6 + $0xec] sm:$0xf]
        %v1942 = vld [vmem:[%s6 + $0xf0] sm:$0xf]
        %v1943 = vld [vmem:[%s6 + $0xf4] sm:$0xf]
        %v1944 = vld [vmem:[%s6 + $0xf8] sm:$0xf]
        %v1945 = vld [vmem:[%s6 + $0xfc] sm:$0xf]
        %v1946 = vld [vmem:[%s6 + $0x100] sm:$0xf]
        %v1947 = vld [vmem:[%s6 + $0x104] sm:$0xf]
        %v1948 = vld [vmem:[%s6 + $0x108] sm:$0xf]
        %v1949 = vld [vmem:[%s6 + $0x10c] sm:$0xf]
        %v1950 = vld [vmem:[%s6 + $0x110] sm:$0xf]
        %v1951 = vld [vmem:[%s6 + $0x114] sm:$0xf]
        %v1952 = vld [vmem:[%s6 + $0x118] sm:$0xf]
        %v1953 = vld [vmem:[%s6 + $0x11c] sm:$0xf]
        %v1954 = vlaneseq
        %v1955 = vshrl.u32 %v1954, 7
        %v1956 = vsub.s32 2, %v1955
        %v1957 = vrot.slane %v336, %v1956
        %v2030 = vunpack.c.l.b16 %v1882
        %v2031 = vunpack.c.l.b16 %v1883
        %v2032 = vunpack.c.l.b16 %v1884
        %v2033 = vunpack.c.l.b16 %v1885
        %v2034 = vunpack.c.l.b16 %v1886
        %v2035 = vunpack.c.l.b16 %v1887
        %v2036 = vunpack.c.l.b16 %v1888
        %v2037 = vunpack.c.l.b16 %v1889
        %v2038 = vunpack.c.l.b16 %v1890
        %v2039 = vunpack.c.l.b16 %v1891
        %v2040 = vunpack.c.l.b16 %v1892
        %v2041 = vunpack.c.l.b16 %v1893
        %v2042 = vunpack.c.l.b16 %v1894
        %v2043 = vunpack.c.l.b16 %v1895
        %v2044 = vunpack.c.l.b16 %v1896
        %v2045 = vunpack.c.l.b16 %v1897
        %v2046 = vunpack.c.l.b16 %v1898
        %v2047 = vunpack.c.l.b16 %v1899
        %v2048 = vunpack.c.l.b16 %v1900
        %v2049 = vunpack.c.l.b16 %v1901
        %v2050 = vunpack.c.l.b16 %v1902
        %v2051 = vunpack.c.l.b16 %v1903
        %v2052 = vunpack.c.l.b16 %v1904
        %v2053 = vunpack.c.l.b16 %v1905
        %v2054 = vunpack.c.l.b16 %v1906
        %v2055 = vunpack.c.l.b16 %v1907
        %v2056 = vunpack.c.l.b16 %v1908
        %v2057 = vunpack.c.l.b16 %v1909
        %v2058 = vunpack.c.l.b16 %v1910
        %v2059 = vunpack.c.l.b16 %v1911
        %v2060 = vunpack.c.l.b16 %v1912
        %v2061 = vunpack.c.l.b16 %v1913
        %v2062 = vunpack.c.l.b16 %v1914
        %v2063 = vunpack.c.l.b16 %v1915
        %v2064 = vunpack.c.l.b16 %v1916
        %v2065 = vunpack.c.l.b16 %v1917
        %v2066 = vunpack.c.l.b16 %v1918
        %v2067 = vunpack.c.l.b16 %v1919
        %v2068 = vunpack.c.l.b16 %v1920
        %v2069 = vunpack.c.l.b16 %v1921
        %v2070 = vunpack.c.l.b16 %v1922
        %v2071 = vunpack.c.l.b16 %v1923
        %v2072 = vunpack.c.l.b16 %v1924
        %v2073 = vunpack.c.l.b16 %v1925
        %v2074 = vunpack.c.l.b16 %v1926
        %v2075 = vunpack.c.l.b16 %v1927
        %v2076 = vunpack.c.l.b16 %v1928
        %v2077 = vunpack.c.l.b16 %v1929
        %v2078 = vunpack.c.l.b16 %v1930
        %v2079 = vunpack.c.l.b16 %v1931
        %v2080 = vunpack.c.l.b16 %v1932
        %v2081 = vunpack.c.l.b16 %v1933
        %v2082 = vunpack.c.l.b16 %v1934
        %v2083 = vunpack.c.l.b16 %v1935
        %v2084 = vunpack.c.l.b16 %v1936
        %v2085 = vunpack.c.l.b16 %v1937
        %v2086 = vunpack.c.l.b16 %v1938
        %v2087 = vunpack.c.l.b16 %v1939
        %v2088 = vunpack.c.l.b16 %v1940
        %v2089 = vunpack.c.l.b16 %v1941
        %v2090 = vunpack.c.l.b16 %v1942
        %v2091 = vunpack.c.l.b16 %v1943
        %v2092 = vunpack.c.l.b16 %v1944
        %v2093 = vunpack.c.l.b16 %v1945
        %v2094 = vunpack.c.l.b16 %v1946
        %v2095 = vunpack.c.l.b16 %v1947
        %v2096 = vunpack.c.l.b16 %v1948
        %v2097 = vunpack.c.l.b16 %v1949
        %v2098 = vunpack.c.l.b16 %v1950
        %v2099 = vunpack.c.l.b16 %v1951
        %v2100 = vunpack.c.l.b16 %v1952
        %v2101 = vunpack.c.l.b16 %v1953
        %v2102 = vpack.c.b16 %v2031, %v2030
        %v2103 = vpack.c.b16 %v2033, %v2032
        %v2104 = vpack.c.b16 %v2035, %v2034
        %v2105 = vpack.c.b16 %v2037, %v2036
        %v2106 = vpack.c.b16 %v2039, %v2038
        %v2107 = vpack.c.b16 %v2041, %v2040
        %v2108 = vpack.c.b16 %v2043, %v2042
        %v2109 = vpack.c.b16 %v2045, %v2044
        %v2110 = vpack.c.b16 %v2047, %v2046
        %v2111 = vpack.c.b16 %v2049, %v2048
        %v2112 = vpack.c.b16 %v2051, %v2050
        %v2113 = vpack.c.b16 %v2053, %v2052
        %v2114 = vpack.c.b16 %v2055, %v2054
        %v2115 = vpack.c.b16 %v2057, %v2056
        %v2116 = vpack.c.b16 %v2059, %v2058
        %v2117 = vpack.c.b16 %v2061, %v2060
        %v2118 = vpack.c.b16 %v2063, %v2062
        %v2119 = vpack.c.b16 %v2065, %v2064
        %v2120 = vpack.c.b16 %v2067, %v2066
        %v2121 = vpack.c.b16 %v2069, %v2068
        %v2122 = vpack.c.b16 %v2071, %v2070
        %v2123 = vpack.c.b16 %v2073, %v2072
        %v2124 = vpack.c.b16 %v2075, %v2074
        %v2125 = vpack.c.b16 %v2077, %v2076
        %v2126 = vpack.c.b16 %v2079, %v2078
        %v2127 = vpack.c.b16 %v2081, %v2080
        %v2128 = vpack.c.b16 %v2083, %v2082
        %v2129 = vpack.c.b16 %v2085, %v2084
        %v2130 = vpack.c.b16 %v2087, %v2086
        %v2131 = vpack.c.b16 %v2089, %v2088
        %v2132 = vpack.c.b16 %v2091, %v2090
        %v2133 = vpack.c.b16 %v2093, %v2092
        %v2134 = vpack.c.b16 %v2095, %v2094
        %v2135 = vpack.c.b16 %v2097, %v2096
        %v2136 = vpack.c.b16 %v2099, %v2098
        %v2137 = vpack.c.b16 %v2101, %v2100
        %v2175 = vsel %vm1052, %v1866, 0
        %v2178 = vsel %vm1052, %v1871, 0
        %v2181 = vsel %vm1052, %v1876, 0
        %v2184 = vsel %vm1052, %v1881, 0
        %2186 = vmatprep.subr.bf16.mxu0 0
        %2187 = vmatpush1.bf16.msra.mxu0 %v2109
        %2188 = vmatprep.subr.bf16.mxu0 0
        %2189 = vmatpush1.bf16.msra.mxu0 %v2108
        %2190 = vmatprep.subr.bf16.mxu0 0
        %2191 = vmatpush1.bf16.msra.mxu0 %v2107
        %2192 = vmatprep.subr.bf16.mxu0 0
        %2193 = vmatpush1.bf16.msra.mxu0 %v2106
        %2194 = vmatprep.subr.bf16.mxu0 0
        %2195 = vmatpush1.bf16.msra.mxu0 %v2105
        %2196 = vmatprep.subr.bf16.mxu0 0
        %2197 = vmatpush1.bf16.msra.mxu0 %v2104
        %2198 = vmatprep.subr.bf16.mxu0 0
        %2199 = vmatpush1.bf16.msra.mxu0 %v2103
        %2200 = vmatprep.subr.bf16.mxu0 0
        %2201 = vmatpush1.bf16.msra.mxu0 %v2102
        %2202 = vmatprep.subr.bf16.mxu0 0
        %2203 = vmatpush2.bf16.msra.mxu0 %v2117
        %2204 = vmatprep.subr.bf16.mxu0 0
        %2205 = vmatpush2.bf16.msra.mxu0 %v2116
        %2206 = vmatprep.subr.bf16.mxu0 0
        %2207 = vmatpush2.bf16.msra.mxu0 %v2115
        %2208 = vmatprep.subr.bf16.mxu0 0
        %2209 = vmatpush2.bf16.msra.mxu0 %v2114
        %2210 = vmatprep.subr.bf16.mxu0 0
        %2211 = vmatpush2.bf16.msra.mxu0 %v2113
        %2212 = vmatprep.subr.bf16.mxu0 0
        %2213 = vmatpush2.bf16.msra.mxu0 %v2112
        %2214 = vmatprep.subr.bf16.mxu0 0
        %2215 = vmatpush2.bf16.msra.mxu0 %v2111
        %2216 = vmatprep.subr.bf16.mxu0 0
        %2217 = vmatpush2.bf16.msra.mxu0 %v2110
        %2218 = vmatprep.mubr.bf16.mxu0 %v1863
        %2219 = vmatmul.mubr.bf16.gmra.mxu0 %v1862
        %v2220 = vpop.f32.mrf.mxu0
        %v2221 = vadd.f32 %v1957, %v2220
        %v2222 = vpop.f32.mrf.mxu0
        %v2223 = vpop.f32.mrf.mxu0
        %v2224 = vadd.f32 %v1957, %v2223
        %v2225 = vpop.f32.mrf.mxu0
        %2226 = vmatprep.mubr.bf16.mxu0 %v1868
        %2227 = vmatmul.mubr.bf16.gmra.mxu0 %v1867
        %v2228 = vpop.f32.mrf.mxu0
        %v2229 = vadd.f32 %v1957, %v2228
        %v2230 = vpop.f32.mrf.mxu0
        %v2231 = vpop.f32.mrf.mxu0
        %v2232 = vadd.f32 %v1957, %v2231
        %v2233 = vpop.f32.mrf.mxu0
        %2234 = vmatprep.mubr.bf16.mxu0 %v1873
        %2235 = vmatmul.mubr.bf16.gmra.mxu0 %v1872
        %v2236 = vpop.f32.mrf.mxu0
        %v2237 = vadd.f32 %v1957, %v2236
        %v2238 = vpop.f32.mrf.mxu0
        %v2239 = vpop.f32.mrf.mxu0
        %v2240 = vadd.f32 %v1957, %v2239
        %v2241 = vpop.f32.mrf.mxu0
        %2242 = vmatprep.mubr.bf16.mxu0 %v1878
        %2243 = vmatmul.mubr.bf16.gmra.mxu0 %v1877
        %v2244 = vpop.f32.mrf.mxu0
        %v2245 = vadd.f32 %v1957, %v2244
        %v2246 = vpop.f32.mrf.mxu0
        %v2247 = vpop.f32.mrf.mxu0
        %v2248 = vadd.f32 %v1957, %v2247
        %v2249 = vpop.f32.mrf.mxu0
        %2250 = vdwg.mxu0
        %2251 = vmatprep.subr.bf16.mxu0 0
        %2252 = vmatpush1.bf16.msra.mxu0 %v2125
        %2253 = vmatprep.subr.bf16.mxu0 0
        %2254 = vmatpush1.bf16.msra.mxu0 %v2124
        %2255 = vmatprep.subr.bf16.mxu0 0
        %2256 = vmatpush1.bf16.msra.mxu0 %v2123
        %2257 = vmatprep.subr.bf16.mxu0 0
        %2258 = vmatpush1.bf16.msra.mxu0 %v2122
        %2259 = vmatprep.subr.bf16.mxu0 0
        %2260 = vmatpush1.bf16.msra.mxu0 %v2121
        %2261 = vmatprep.subr.bf16.mxu0 0
        %2262 = vmatpush1.bf16.msra.mxu0 %v2120
        %2263 = vmatprep.subr.bf16.mxu0 0
        %2264 = vmatpush1.bf16.msra.mxu0 %v2119
        %2265 = vmatprep.subr.bf16.mxu0 0
        %2266 = vmatpush1.bf16.msra.mxu0 %v2118
        %2267 = vmatprep.subr.bf16.mxu0 0
        %2268 = vmatpush2.bf16.msra.mxu0 %v2133
        %2269 = vmatprep.subr.bf16.mxu0 0
        %2270 = vmatpush2.bf16.msra.mxu0 %v2132
        %2271 = vmatprep.subr.bf16.mxu0 0
        %2272 = vmatpush2.bf16.msra.mxu0 %v2131
        %2273 = vmatprep.subr.bf16.mxu0 0
        %2274 = vmatpush2.bf16.msra.mxu0 %v2130
        %2275 = vmatprep.subr.bf16.mxu0 0
        %2276 = vmatpush2.bf16.msra.mxu0 %v2129
        %2277 = vmatprep.subr.bf16.mxu0 0
        %2278 = vmatpush2.bf16.msra.mxu0 %v2128
        %2279 = vmatprep.subr.bf16.mxu0 0
        %2280 = vmatpush2.bf16.msra.mxu0 %v2127
        %2281 = vmatprep.subr.bf16.mxu0 0
        %2282 = vmatpush2.bf16.msra.mxu0 %v2126
        %2283 = vmatprep.mubr.bf16.mxu0 %v1865
        %2284 = vmatmul.mubr.bf16.gmra.mxu0 %v1864
        %v2285 = vpop.f32.mrf.mxu0
        %v2286 = vadd.f32 %v2221, %v2285
        %v2287 = vpop.f32.mrf.mxu0
        %v2288 = vpop.f32.mrf.mxu0
        %v2289 = vadd.f32 %v2224, %v2288
        %v2290 = vpop.f32.mrf.mxu0
        %2291 = vmatprep.mubr.bf16.mxu0 %v1870
        %2292 = vmatmul.mubr.bf16.gmra.mxu0 %v1869
        %v2293 = vpop.f32.mrf.mxu0
        %v2294 = vadd.f32 %v2229, %v2293
        %v2295 = vpop.f32.mrf.mxu0
        %v2296 = vpop.f32.mrf.mxu0
        %v2297 = vadd.f32 %v2232, %v2296
        %v2298 = vpop.f32.mrf.mxu0
        %2299 = vmatprep.mubr.bf16.mxu0 %v1875
        %2300 = vmatmul.mubr.bf16.gmra.mxu0 %v1874
        %v2301 = vpop.f32.mrf.mxu0
        %v2302 = vadd.f32 %v2237, %v2301
        %v2303 = vpop.f32.mrf.mxu0
        %v2304 = vpop.f32.mrf.mxu0
        %v2305 = vadd.f32 %v2240, %v2304
        %v2306 = vpop.f32.mrf.mxu0
        %2307 = vmatprep.mubr.bf16.mxu0 %v1880
        %2308 = vmatmul.mubr.bf16.gmra.mxu0 %v1879
        %v2309 = vpop.f32.mrf.mxu0
        %v2310 = vadd.f32 %v2245, %v2309
        %v2311 = vpop.f32.mrf.mxu0
        %v2312 = vpop.f32.mrf.mxu0
        %v2313 = vadd.f32 %v2248, %v2312
        %v2314 = vpop.f32.mrf.mxu0
        %2315 = vdwg.mxu0
        %2316 = vmatprep.subr.bf16.mxu0 0
        %2317 = vmatpush1.bf16.msra.mxu0 0
        %2318 = vmatprep.subr.bf16.mxu0 0
        %2319 = vmatpush1.bf16.msra.mxu0 0
        %2320 = vmatprep.subr.bf16.mxu0 0
        %2321 = vmatpush1.bf16.msra.mxu0 0
        %2322 = vmatprep.subr.bf16.mxu0 0
        %2323 = vmatpush1.bf16.msra.mxu0 0
        %2324 = vmatprep.subr.bf16.mxu0 0
        %2325 = vmatpush1.bf16.msra.mxu0 %v2137
        %2326 = vmatprep.subr.bf16.mxu0 0
        %2327 = vmatpush1.bf16.msra.mxu0 %v2136
        %2328 = vmatprep.subr.bf16.mxu0 0
        %2329 = vmatpush1.bf16.msra.mxu0 %v2135
        %2330 = vmatprep.subr.bf16.mxu0 0
        %2331 = vmatpush1.bf16.msra.mxu0 %v2134
        %2332 = vmatprep.subr.bf16.mxu0 0
        %2333 = vmatpush2.bf16.msra.mxu0 0
        %2334 = vmatprep.subr.bf16.mxu0 0
        %2335 = vmatpush2.bf16.msra.mxu0 0
        %2336 = vmatprep.subr.bf16.mxu0 0
        %2337 = vmatpush2.bf16.msra.mxu0 0
        %2338 = vmatprep.subr.bf16.mxu0 0
        %2339 = vmatpush2.bf16.msra.mxu0 0
        %2340 = vmatprep.subr.bf16.mxu0 0
        %2341 = vmatpush2.bf16.msra.mxu0 0
        %2342 = vmatprep.subr.bf16.mxu0 0
        %2343 = vmatpush2.bf16.msra.mxu0 0
        %2344 = vmatprep.subr.bf16.mxu0 0
        %2345 = vmatpush2.bf16.msra.mxu0 0
        %2346 = vmatprep.subr.bf16.mxu0 0
        %2347 = vmatpush2.bf16.msra.mxu0 0
        %2348 = vmatprep.mubr.bf16.mxu0 0
        %2349 = vmatmul.mubr.bf16.gmra.mxu0 %v2175
        %v2350 = vpop.f32.mrf.mxu0
        %v2351 = vadd.f32 %v2286, %v2350
        %v2352 = vpop.f32.mrf.mxu0
        %v2353 = vpop.f32.mrf.mxu0
        %v2354 = vadd.f32 %v2289, %v2353
        %v2355 = vpop.f32.mrf.mxu0
        %2356 = vmatprep.mubr.bf16.mxu0 0
        %2357 = vmatmul.mubr.bf16.gmra.mxu0 %v2178
        %v2358 = vpop.f32.mrf.mxu0
        %v2359 = vadd.f32 %v2294, %v2358
        %v2360 = vpop.f32.mrf.mxu0
        %v2361 = vpop.f32.mrf.mxu0
        %v2362 = vadd.f32 %v2297, %v2361
        %v2363 = vpop.f32.mrf.mxu0
        %2364 = vmatprep.mubr.bf16.mxu0 0
        %2365 = vmatmul.mubr.bf16.gmra.mxu0 %v2181
        %v2366 = vpop.f32.mrf.mxu0
        %v2367 = vadd.f32 %v2302, %v2366
        %v2368 = vpop.f32.mrf.mxu0
        %v2369 = vpop.f32.mrf.mxu0
        %v2370 = vadd.f32 %v2305, %v2369
        %v2371 = vpop.f32.mrf.mxu0
        %2372 = vmatprep.mubr.bf16.mxu0 0
        %2373 = vmatmul.mubr.bf16.gmra.mxu0 %v2184
        %v2374 = vpop.f32.mrf.mxu0
        %v2375 = vadd.f32 %v2310, %v2374
        %v2376 = vpop.f32.mrf.mxu0
        %v2377 = vpop.f32.mrf.mxu0
        %v2378 = vadd.f32 %v2313, %v2377
        %v2379 = vpop.f32.mrf.mxu0
        %2380 = vdwg.mxu0
        %v2381 = vpack.c.bf16 %v320, %v319
        %v2382 = vpack.c.bf16 %v322, %v321
        %v2383 = vpack.c.bf16 %v324, %v323
        %v2384 = vpack.c.bf16 %v326, %v325
        %v2385 = vld [vmem:[%s7] sm:$0xf]
        %v2386 = vld [vmem:[%s7 + $0x4] sm:$0xf]
        %v2387 = vld [vmem:[%s7 + $0x8] sm:$0xf]
        %v2388 = vld [vmem:[%s7 + $0xc] sm:$0xf]
        %v2393 = vunpack.c.l.b16 %v2385
        %v2394 = vunpack.c.l.b16 %v2386
        %v2395 = vunpack.c.l.b16 %v2387
        %v2396 = vunpack.c.l.b16 %v2388
        %v2397 = vpack.c.b16 %v2394, %v2393
        %v2398 = vpack.c.b16 %v2396, %v2395
        %v2402 = vsel %vm337, %v2381, 0
        %v2405 = vsel %vm337, %v2382, 0
        %v2408 = vsel %vm337, %v2383, 0
        %v2411 = vsel %vm337, %v2384, 0
        %2413 = vmatprep.subr.bf16.mxu0 0
        %2414 = vmatpush1.bf16.msra.mxu0 0
        %2415 = vmatprep.subr.bf16.mxu0 0
        %2416 = vmatpush1.bf16.msra.mxu0 0
        %2417 = vmatprep.subr.bf16.mxu0 0
        %2418 = vmatpush1.bf16.msra.mxu0 0
        %2419 = vmatprep.subr.bf16.mxu0 0
        %2420 = vmatpush1.bf16.msra.mxu0 0
        %2421 = vmatprep.subr.bf16.mxu0 0
        %2422 = vmatpush1.bf16.msra.mxu0 0
        %2423 = vmatprep.subr.bf16.mxu0 0
        %2424 = vmatpush1.bf16.msra.mxu0 0
        %2425 = vmatprep.subr.bf16.mxu0 0
        %2426 = vmatpush1.bf16.msra.mxu0 %v2398
        %2427 = vmatprep.subr.bf16.mxu0 0
        %2428 = vmatpush1.bf16.msra.mxu0 %v2397
        %2429 = vmatprep.subr.bf16.mxu0 0
        %2430 = vmatpush2.bf16.msra.mxu0 0
        %2431 = vmatprep.subr.bf16.mxu0 0
        %2432 = vmatpush2.bf16.msra.mxu0 0
        %2433 = vmatprep.subr.bf16.mxu0 0
        %2434 = vmatpush2.bf16.msra.mxu0 0
        %2435 = vmatprep.subr.bf16.mxu0 0
        %2436 = vmatpush2.bf16.msra.mxu0 0
        %2437 = vmatprep.subr.bf16.mxu0 0
        %2438 = vmatpush2.bf16.msra.mxu0 0
        %2439 = vmatprep.subr.bf16.mxu0 0
        %2440 = vmatpush2.bf16.msra.mxu0 0
        %2441 = vmatprep.subr.bf16.mxu0 0
        %2442 = vmatpush2.bf16.msra.mxu0 0
        %2443 = vmatprep.subr.bf16.mxu0 0
        %2444 = vmatpush2.bf16.msra.mxu0 0
        %2445 = vmatprep.mubr.bf16.mxu0 0
        %2446 = vmatmul.mubr.bf16.gmra.mxu0 %v2402
        %v2447 = vpop.f32.mrf.mxu0
        %v2448 = vadd.f32 0.0, %v2447
        %v2449 = vpop.f32.mrf.mxu0
        %v2450 = vpop.f32.mrf.mxu0
        %v2451 = vadd.f32 0.0, %v2450
        %v2452 = vpop.f32.mrf.mxu0
        %2453 = vmatprep.mubr.bf16.mxu0 0
        %2454 = vmatmul.mubr.bf16.gmra.mxu0 %v2405
        %v2455 = vpop.f32.mrf.mxu0
        %v2456 = vadd.f32 0.0, %v2455
        %v2457 = vpop.f32.mrf.mxu0
        %v2458 = vpop.f32.mrf.mxu0
        %v2459 = vadd.f32 0.0, %v2458
        %v2460 = vpop.f32.mrf.mxu0
        %2461 = vmatprep.mubr.bf16.mxu0 0
        %2462 = vmatmul.mubr.bf16.gmra.mxu0 %v2408
        %v2463 = vpop.f32.mrf.mxu0
        %v2464 = vadd.f32 0.0, %v2463
        %v2465 = vpop.f32.mrf.mxu0
        %v2466 = vpop.f32.mrf.mxu0
        %v2467 = vadd.f32 0.0, %v2466
        %v2468 = vpop.f32.mrf.mxu0
        %2469 = vmatprep.mubr.bf16.mxu0 0
        %2470 = vmatmul.mubr.bf16.gmra.mxu0 %v2411
        %v2471 = vpop.f32.mrf.mxu0
        %v2472 = vadd.f32 0.0, %v2471
        %v2473 = vpop.f32.mrf.mxu0
        %v2474 = vpop.f32.mrf.mxu0
        %v2475 = vadd.f32 0.0, %v2474
        %v2476 = vpop.f32.mrf.mxu0
        %2477 = vdwg.mxu0
        %v2478 = vadd.f32 %v2351, %v2448
        %v2479 = vadd.f32 %v2354, %v2451
        %v2480 = vadd.f32 %v2359, %v2456
        %v2481 = vadd.f32 %v2362, %v2459
        %v2482 = vadd.f32 %v2367, %v2464
        %v2483 = vadd.f32 %v2370, %v2467
        %v2484 = vadd.f32 %v2375, %v2472
        %v2485 = vadd.f32 %v2378, %v2475
        %v2486 = vlaneseq
        %v2487 = vshrl.u32 %v2486, 7
        %v2488 = vsub.s32 3, %v2487
        %v2489 = vrot.slane %v336, %v2488
        %v2490 = vadd.f32 %v2478, %v2489
        %v2491 = vadd.f32 %v2479, %v2489
        %v2492 = vadd.f32 %v2480, %v2489
        %v2493 = vadd.f32 %v2481, %v2489
        %v2494 = vadd.f32 %v2482, %v2489
        %v2495 = vadd.f32 %v2483, %v2489
        %v2496 = vadd.f32 %v2484, %v2489
        %v2497 = vadd.f32 %v2485, %v2489
        %2498 = vst.msk [vmem:[%s309] sm:$0xff] %vm1052, %v2490
        %2499 = vst.msk [vmem:[%s309 + $0x8] sm:$0xff] %vm1052, %v2491
        %2500 = vst.msk [vmem:[%s309 + $0x10] sm:$0xff] %vm1052, %v2492
        %2501 = vst.msk [vmem:[%s309 + $0x18] sm:$0xff] %vm1052, %v2493
        %2502 = vst.msk [vmem:[%s309 + $0x20] sm:$0xff] %vm1052, %v2494
        %2503 = vst.msk [vmem:[%s309 + $0x28] sm:$0xff] %vm1052, %v2495
        %2504 = vst.msk [vmem:[%s309 + $0x30] sm:$0xff] %vm1052, %v2496
        %2505 = vst.msk [vmem:[%s309 + $0x38] sm:$0xff] %vm1052, %v2497
        %s2506 = sand.u32 %s208, 1
        %s2507 = scalar_lea.sflag [#allocation3], %s2506
        %s2508 = sand.u32 %s208, 1
        %s2509 = smul.addr %s2508, 64
        %s2510 = scalar_lea.vmem [#allocation2], %s2509
        // Predicated region
        $region53: #{resblock_forward.1} parent=51 // pred_check
          %p2511 = pneg %p218
        $region54: #{resblock_forward.1} parent=51 // pred_check_branch
          %2513 = sbr.rel (%p2511) target = $region56
        $region55: #{resblock_forward.1} parent=51 // pred_region
          %s2515 = ssub.s32 1024, 1024
          %2516 = vsyncadd %s2507, %s2515
          %s2517 = smul.addr %s22, 8
          %s2518 = smul.addr %s2517, 128
          %s2519 = scalar_lea.hbm %s8, %s2518
          %s2520 = sshll.u32 %s2510, 4
          %s2521 = int_to_ptr.vmem [resolvable:$true] %s2520
          %2526 = dma.vmem_to_hbm [thread:$0]  %s2521, 1024, %s2519, %s2507, 128, 128, 8
        $region56: #{resblock_forward.1} parent=51 // pred_fallthru
          _
      $region52: #{resblock_forward.1} parent=5 // pred_fallthru
        _
      %p2527 = scmp.le.s32.totalorder 2, %s17
      // Predicated region
      $region57: #{resblock_forward.1} parent=5 // pred_check
        %p2528 = pneg %p2527
      $region58: #{resblock_forward.1} parent=5 // pred_check_branch
        %2530 = sbr.rel (%p2528) target = $region60
      $region59: #{resblock_forward.1} parent=5 // pred_region
        %s2531 = ssub.s32 %s17, 2
        // Predicated region
        $region61: #{resblock_forward.1} parent=59 // pred_check
          %p2532 = pneg %p224
        $region62: #{resblock_forward.1} parent=59 // pred_check_branch
          %2534 = sbr.rel (%p2532) target = $region64
        $region63: #{resblock_forward.1} parent=59 // pred_region
          %s2535 = sand.u32 %s209, 1
          %s2536 = scalar_lea.sflag [#allocation3], %s2535
          %s2537 = sand.u32 %s209, 1
          %s2538 = smul.addr %s2537, 64
          %s2539 = scalar_lea.vmem [#allocation2], %s2538
          %2540 = dma.done %s2536, 1024
        $region64: #{resblock_forward.1} parent=59 // pred_fallthru
          _
      $region60: #{resblock_forward.1} parent=5 // pred_fallthru
        _
    $region6: #{resblock_forward.1} parent=1 // loop_footer
      %s21 = sadd.s32 1, %s17
    $region7: #{resblock_forward.1} parent=1 // loop_footer_branch
      %16 = sbr.rel target = $region3
    $region8: #{resblock_forward.1} parent=1 // loop_exit
      _
    %2541 = vsyncpa [#allocation3], 1
    %s2542 = scalar_lea.sflag [#allocation3], 1
    %2543 = vsyncpa %s2542, 1

</llo_original>
